<compile_context>
chip_gen: v7x
topology: tpu7x:2x2x1
jax: 0.10.0
libtpu: 0.0.40
codegen_flags: <defaults>
</compile_context>

<pallas_src>
import jax
import jax.numpy as jnp
from jax.experimental import pallas as pl
from jax.experimental.pallas import tpu as pltpu


def vgl_forward(feats, adjs, params):
    B, C, S, N, F = feats.shape
    D = params["w_enc"].shape[1]
    H = params["w1"].shape[1]
    K = params["w_dec"].shape[1]
    G = C * S          # graphs per batch element
    M = S * N          # nodes per channel after section concat

    feats_r = feats.reshape(B, G, N, F).astype(jnp.float32)
    adjs_r = adjs.reshape(B, G, N, N).astype(jnp.float32)

    def kernel(feat_ref, adj_ref, w_enc_ref, b_enc_ref,
               w1_ref, w2_ref, wd_ref, bd_ref, out_ref):
        feat = feat_ref[0]                                             # (G, N, F)
        adj = adj_ref[0]                                               # (G, N, N)

        # ---- shared-weight HGCN encoder over all C*S graphs of this batch elem ----
        agg = jnp.einsum('gij,gjf->gif', adj, feat,
                         preferred_element_type=jnp.float32)           # (G, N, F)
        agg2d = agg.reshape(G * N, F)                                   # stack graphs -> MXU M dim
        h = jnp.dot(agg2d, w_enc_ref[...],
                    preferred_element_type=jnp.float32)                 # (G*N, D)
        h = jnp.maximum(h + b_enc_ref[...], 0.0)                        # relu

        # ---- RDM module: cosine similarity between per-channel embeddings ----
        # (torch.cat over sections + flatten only re-orders elements; the cosine
        #  similarity only needs sums over all elements, so (C, M, D) is equivalent)
        hh = h.reshape(C, M, D)                                         # (C, M, D)
        sq = jnp.sum(hh * hh, axis=2)                                   # (C, M)
        norm_sq = jnp.sum(sq, axis=1, keepdims=True)                    # (C, 1)
        inv = jax.lax.rsqrt(norm_sq + 1e-8)                             # (C, 1)
        xn = hh * inv[:, :, None]                                       # normalized
        prod = xn[:, None, :, :] * xn[None, :, :, :]                    # (C, C, M, D)
        brain = jnp.sum(jnp.sum(prod, axis=3), axis=2)                  # (C, C)

        # ---- MochaGCN encode + decode + global_mean_pool + sigmoid ----
        # one-hot features (eye(C)) make A @ eye(C) @ W1 == A @ W1.
        h1 = jnp.maximum(
            jnp.dot(brain, w1_ref[...], preferred_element_type=jnp.float32), 0.0)  # (C, H)
        h1w2 = jnp.dot(h1, w2_ref[...], preferred_element_type=jnp.float32)        # (C, H)
        h2 = jnp.dot(brain, h1w2, preferred_element_type=jnp.float32)              # (C, H)
        # mean-pool commutes with the affine decoder -> pool first (cheaper decode)
        pooled = jnp.mean(h2, axis=0, keepdims=True)                               # (1, H)
        logits = jnp.dot(pooled, wd_ref[...],
                         preferred_element_type=jnp.float32) + bd_ref[...]         # (1, K)
        out_ref[0] = jax.nn.sigmoid(logits)

    out = pl.pallas_call(
        kernel,
        out_shape=jax.ShapeDtypeStruct((B, 1, K), jnp.float32),
        grid=(B,),
        in_specs=[
            pl.BlockSpec((1, G, N, F), lambda b: (b, 0, 0, 0)),
            pl.BlockSpec((1, G, N, N), lambda b: (b, 0, 0, 0)),
            pl.BlockSpec((F, D), lambda b: (0, 0)),
            pl.BlockSpec((1, D), lambda b: (0, 0)),
            pl.BlockSpec((C, H), lambda b: (0, 0)),
            pl.BlockSpec((H, H), lambda b: (0, 0)),
            pl.BlockSpec((H, K), lambda b: (0, 0)),
            pl.BlockSpec((1, K), lambda b: (0, 0)),
        ],
        out_specs=pl.BlockSpec((1, 1, K), lambda b: (b, 0, 0)),
        compiler_params=pltpu.CompilerParams(
            dimension_semantics=("parallel",)),
    )(feats_r, adjs_r, params["w_enc"], params["b_enc"],
      params["w1"], params["w2"], params["w_dec"], params["b_dec"])

    return out[:, 0, :]                                                 # (B, K)


def init_params(key, F, D, C, H, K):
    ks = jax.random.split(key, 5)
    return {
        "w_enc": jax.random.normal(ks[0], (F, D), jnp.float32) * 0.1,
        "b_enc": jnp.zeros((1, D), jnp.float32),
        "w1": jax.random.normal(ks[1], (C, H), jnp.float32) * 0.1,
        "w2": jax.random.normal(ks[2], (H, H), jnp.float32) * 0.1,
        "w_dec": jax.random.normal(ks[3], (H, K), jnp.float32) * 0.1,
        "b_dec": jnp.zeros((1, K), jnp.float32),
    }


if __name__ == "__main__":
    # small shapes consistent with the module
    B, C, S, N, F = 2, 4, 2, 8, 16     # batch, n_channels, n_sections, n_nodes, feat_dim
    D, H, K = 8, 16, 2                 # hgcn dim, mocha hidden dim, n_classes

    key = jax.random.PRNGKey(0)
    k_feat, k_adj, k_par = jax.random.split(key, 3)

    feats = jax.random.normal(k_feat, (B, C, S, N, F), jnp.float32)
    adjs_raw = jax.random.uniform(k_adj, (B, C, S, N, N), jnp.float32)
    adjs = 0.5 * (adjs_raw + jnp.swapaxes(adjs_raw, -1, -2))           # symmetric adjacency

    params = init_params(k_par, F, D, C, H, K)

    pred = vgl_forward(feats, adjs, params)
    pred = jax.block_until_ready(pred)
    assert pred.shape == (B, K)
    assert bool(jnp.all(jnp.isfinite(pred)))
    print("KERNEL_OK")
</pallas_src>

<mosaic_0001>
module attributes {stable_mosaic.version = 11 : i64} {
  func.func @kernel(%arg0: i32, %arg1: memref<1x8x8x16xf32, #tpu.memory_space<vmem>>, %arg2: memref<1x8x8x8xf32, #tpu.memory_space<vmem>>, %arg3: memref<16x8xf32, #tpu.memory_space<vmem>>, %arg4: memref<1x8xf32, #tpu.memory_space<vmem>>, %arg5: memref<4x16xf32, #tpu.memory_space<vmem>>, %arg6: memref<16x16xf32, #tpu.memory_space<vmem>>, %arg7: memref<16x2xf32, #tpu.memory_space<vmem>>, %arg8: memref<1x2xf32, #tpu.memory_space<vmem>>, %arg9: memref<1x1x2xf32, #tpu.memory_space<vmem>>) attributes {dimension_semantics = [#tpu.dimension_semantics<parallel>], iteration_bounds = array<i64: 2>, scalar_prefetch = 0 : i64, scratch_operands = 0 : i64, tpu.core_type = #tpu.core_type<tc>, window_params = [{transform_indices = @transform_0, window_bounds = array<i64: 1, 8, 8, 16>}, {transform_indices = @transform_1, window_bounds = array<i64: 1, 8, 8, 8>}, {pipeline_mode = #tpu.pipeline_mode<synchronous>, transform_indices = @transform_2, window_bounds = array<i64: 16, 8>}, {pipeline_mode = #tpu.pipeline_mode<synchronous>, transform_indices = @transform_3, window_bounds = array<i64: 1, 8>}, {pipeline_mode = #tpu.pipeline_mode<synchronous>, transform_indices = @transform_4, window_bounds = array<i64: 4, 16>}, {pipeline_mode = #tpu.pipeline_mode<synchronous>, transform_indices = @transform_5, window_bounds = array<i64: 16, 16>}, {pipeline_mode = #tpu.pipeline_mode<synchronous>, transform_indices = @transform_6, window_bounds = array<i64: 16, 2>}, {pipeline_mode = #tpu.pipeline_mode<synchronous>, transform_indices = @transform_7, window_bounds = array<i64: 1, 2>}, {transform_indices = @transform_8, window_bounds = array<i64: 1, 1, 2>}]} {
    %c0 = arith.constant 0 : index
    %c0_0 = arith.constant 0 : index
    %c0_1 = arith.constant 0 : index
    %c0_2 = arith.constant 0 : index
    %0 = vector.load %arg1[%c0, %c0_0, %c0_1, %c0_2] : memref<1x8x8x16xf32, #tpu.memory_space<vmem>>, vector<1x8x8x16xf32>
    %1 = vector.shape_cast %0 : vector<1x8x8x16xf32> to vector<8x8x16xf32>
    %c0_3 = arith.constant 0 : index
    %c0_4 = arith.constant 0 : index
    %c0_5 = arith.constant 0 : index
    %c0_6 = arith.constant 0 : index
    %2 = vector.load %arg2[%c0_3, %c0_4, %c0_5, %c0_6] : memref<1x8x8x8xf32, #tpu.memory_space<vmem>>, vector<1x8x8x8xf32>
    %3 = vector.shape_cast %2 : vector<1x8x8x8xf32> to vector<8x8x8xf32>
    "tpu.trace_start"() <{level = 10 : i32, message = "gij,gjf->gif"}> : () -> ()
    %cst = arith.constant dense<0.000000e+00> : vector<8x8x16xf32>
    %4 = tpu.matmul %3, %1, %cst {dimension_numbers = #tpu.dot_dimension_numbers<[2], [1], [1], [2], [0, 0, 0, 1, 1, 2], [0], [0]>} : vector<8x8x8xf32>, vector<8x8x16xf32>, vector<8x8x16xf32> -> vector<8x8x16xf32>
    "tpu.trace_stop"() : () -> ()
    %5 = vector.shape_cast %4 : vector<8x8x16xf32> to vector<64x16xf32>
    %c0_7 = arith.constant 0 : index
    %c0_8 = arith.constant 0 : index
    %6 = vector.load %arg3[%c0_7, %c0_8] : memref<16x8xf32, #tpu.memory_space<vmem>>, vector<16x8xf32>
    %cst_9 = arith.constant dense<0.000000e+00> : vector<64x8xf32>
    %7 = tpu.matmul %5, %6, %cst_9 {dimension_numbers = #tpu.dot_dimension_numbers<[1], [0], [0], [1], [0, 0, 1, 1], [], []>} : vector<64x16xf32>, vector<16x8xf32>, vector<64x8xf32> -> vector<64x8xf32>
    %c0_10 = arith.constant 0 : index
    %c0_11 = arith.constant 0 : index
    %8 = vector.load %arg4[%c0_10, %c0_11] : memref<1x8xf32, #tpu.memory_space<vmem>>, vector<1x8xf32>
    %9 = vector.broadcast %8 : vector<1x8xf32> to vector<64x8xf32>
    %10 = arith.addf %7, %9 : vector<64x8xf32>
    %cst_12 = arith.constant 0.000000e+00 : f32
    %11 = vector.broadcast %cst_12 : f32 to vector<64x8xf32>
    %12 = arith.maximumf %10, %11 : vector<64x8xf32>
    %13 = vector.shape_cast %12 : vector<64x8xf32> to vector<4x16x8xf32>
    %14 = arith.mulf %13, %13 : vector<4x16x8xf32>
    %cst_13 = arith.constant dense<0.000000e+00> : vector<4x16xf32>
    %15 = vector.multi_reduction <add>, %14, %cst_13 [2] : vector<4x16x8xf32> to vector<4x16xf32>
    %cst_14 = arith.constant dense<0.000000e+00> : vector<4xf32>
    %16 = vector.multi_reduction <add>, %15, %cst_14 [1] : vector<4x16xf32> to vector<4xf32>
    %17 = vector.shape_cast %16 : vector<4xf32> to vector<4x1xf32>
    %cst_15 = arith.constant 9.99999993E-9 : f32
    %18 = vector.broadcast %cst_15 : f32 to vector<4x1xf32>
    %19 = arith.addf %17, %18 : vector<4x1xf32>
    %20 = math.rsqrt %19 : vector<4x1xf32>
    %21 = vector.shape_cast %20 : vector<4x1xf32> to vector<4x1x1xf32>
    %22 = vector.broadcast %21 : vector<4x1x1xf32> to vector<4x16x8xf32>
    %23 = arith.mulf %13, %22 : vector<4x16x8xf32>
    %24 = vector.shape_cast %23 : vector<4x16x8xf32> to vector<4x1x16x8xf32>
    %25 = vector.shape_cast %23 : vector<4x16x8xf32> to vector<1x4x16x8xf32>
    %26 = vector.broadcast %24 : vector<4x1x16x8xf32> to vector<4x4x16x8xf32>
    %27 = vector.broadcast %25 : vector<1x4x16x8xf32> to vector<4x4x16x8xf32>
    %28 = arith.mulf %26, %27 : vector<4x4x16x8xf32>
    %cst_16 = arith.constant dense<0.000000e+00> : vector<4x4x16xf32>
    %29 = vector.multi_reduction <add>, %28, %cst_16 [3] : vector<4x4x16x8xf32> to vector<4x4x16xf32>
    %cst_17 = arith.constant dense<0.000000e+00> : vector<4x4xf32>
    %30 = vector.multi_reduction <add>, %29, %cst_17 [2] : vector<4x4x16xf32> to vector<4x4xf32>
    %c0_18 = arith.constant 0 : index
    %c0_19 = arith.constant 0 : index
    %31 = vector.load %arg5[%c0_18, %c0_19] : memref<4x16xf32, #tpu.memory_space<vmem>>, vector<4x16xf32>
    %cst_20 = arith.constant dense<0.000000e+00> : vector<4x16xf32>
    %32 = tpu.matmul %30, %31, %cst_20 {dimension_numbers = #tpu.dot_dimension_numbers<[1], [0], [0], [1], [0, 0, 1, 1], [], []>} : vector<4x4xf32>, vector<4x16xf32>, vector<4x16xf32> -> vector<4x16xf32>
    %cst_21 = arith.constant 0.000000e+00 : f32
    %33 = vector.broadcast %cst_21 : f32 to vector<4x16xf32>
    %34 = arith.maximumf %32, %33 : vector<4x16xf32>
    %c0_22 = arith.constant 0 : index
    %c0_23 = arith.constant 0 : index
    %35 = vector.load %arg6[%c0_22, %c0_23] : memref<16x16xf32, #tpu.memory_space<vmem>>, vector<16x16xf32>
    %cst_24 = arith.constant dense<0.000000e+00> : vector<4x16xf32>
    %36 = tpu.matmul %34, %35, %cst_24 {dimension_numbers = #tpu.dot_dimension_numbers<[1], [0], [0], [1], [0, 0, 1, 1], [], []>} : vector<4x16xf32>, vector<16x16xf32>, vector<4x16xf32> -> vector<4x16xf32>
    %cst_25 = arith.constant dense<0.000000e+00> : vector<4x16xf32>
    %37 = tpu.matmul %30, %36, %cst_25 {dimension_numbers = #tpu.dot_dimension_numbers<[1], [0], [0], [1], [0, 0, 1, 1], [], []>} : vector<4x4xf32>, vector<4x16xf32>, vector<4x16xf32> -> vector<4x16xf32>
    %cst_26 = arith.constant dense<0.000000e+00> : vector<16xf32>
    %38 = vector.multi_reduction <add>, %37, %cst_26 [0] : vector<4x16xf32> to vector<16xf32>
    %39 = vector.shape_cast %38 : vector<16xf32> to vector<1x16xf32>
    %cst_27 = arith.constant 4.000000e+00 : f32
    %40 = vector.broadcast %cst_27 : f32 to vector<1x16xf32>
    %41 = arith.divf %39, %40 : vector<1x16xf32>
    %c0_28 = arith.constant 0 : index
    %c0_29 = arith.constant 0 : index
    %42 = vector.load %arg7[%c0_28, %c0_29] : memref<16x2xf32, #tpu.memory_space<vmem>>, vector<16x2xf32>
    %cst_30 = arith.constant dense<0.000000e+00> : vector<1x2xf32>
    %43 = tpu.matmul %41, %42, %cst_30 {dimension_numbers = #tpu.dot_dimension_numbers<[1], [0], [0], [1], [0, 0, 1, 1], [], []>} : vector<1x16xf32>, vector<16x2xf32>, vector<1x2xf32> -> vector<1x2xf32>
    %c0_31 = arith.constant 0 : index
    %c0_32 = arith.constant 0 : index
    %44 = vector.load %arg8[%c0_31, %c0_32] : memref<1x2xf32, #tpu.memory_space<vmem>>, vector<1x2xf32>
    %45 = arith.addf %43, %44 : vector<1x2xf32>
    %46 = arith.negf %45 : vector<1x2xf32>
    %47 = math.exp %46 : vector<1x2xf32>
    %cst_33 = arith.constant 1.000000e+00 : f32
    %48 = vector.broadcast %cst_33 : f32 to vector<1x2xf32>
    %49 = arith.addf %48, %47 : vector<1x2xf32>
    %50 = arith.divf %48, %49 : vector<1x2xf32>
    %c0_34 = arith.constant 0 : index
    %c0_35 = arith.constant 0 : index
    %c0_36 = arith.constant 0 : index
    %51 = vector.load %arg9[%c0_34, %c0_35, %c0_36] : memref<1x1x2xf32, #tpu.memory_space<vmem>>, vector<1x1x2xf32>
    %52 = vector.shape_cast %51 : vector<1x1x2xf32> to vector<1x2xf32>
    %53 = vector.shape_cast %50 : vector<1x2xf32> to vector<1x1x2xf32>
    tpu.vector_store %arg9[%c0_34, %c0_35, %c0_36], %53 {strides = array<i32>} : memref<1x1x2xf32, #tpu.memory_space<vmem>>, vector<1x1x2xf32>,
    return
  }
  func.func @transform_0(%arg0: i32) -> (i32, i32, i32, i32) {
    %c0_i32 = arith.constant 0 : i32
    %c0_i32_0 = arith.constant 0 : i32
    %c0_i32_1 = arith.constant 0 : i32
    %c0_i32_2 = arith.constant 0 : i32
    return %arg0, %c0_i32, %c0_i32_0, %c0_i32_1 : i32, i32, i32, i32
  }
  func.func @transform_1(%arg0: i32) -> (i32, i32, i32, i32) {
    %c0_i32 = arith.constant 0 : i32
    %c0_i32_0 = arith.constant 0 : i32
    %c0_i32_1 = arith.constant 0 : i32
    %c0_i32_2 = arith.constant 0 : i32
    return %arg0, %c0_i32, %c0_i32_0, %c0_i32_1 : i32, i32, i32, i32
  }
  func.func @transform_2(%arg0: i32) -> (i32, i32) {
    %c0_i32 = arith.constant 0 : i32
    %c0_i32_0 = arith.constant 0 : i32
    %c0_i32_1 = arith.constant 0 : i32
    return %c0_i32, %c0_i32_0 : i32, i32
  }
  func.func @transform_3(%arg0: i32) -> (i32, i32) {
    %c0_i32 = arith.constant 0 : i32
    %c0_i32_0 = arith.constant 0 : i32
    %c0_i32_1 = arith.constant 0 : i32
    return %c0_i32, %c0_i32_0 : i32, i32
  }
  func.func @transform_4(%arg0: i32) -> (i32, i32) {
    %c0_i32 = arith.constant 0 : i32
    %c0_i32_0 = arith.constant 0 : i32
    %c0_i32_1 = arith.constant 0 : i32
    return %c0_i32, %c0_i32_0 : i32, i32
  }
  func.func @transform_5(%arg0: i32) -> (i32, i32) {
    %c0_i32 = arith.constant 0 : i32
    %c0_i32_0 = arith.constant 0 : i32
    %c0_i32_1 = arith.constant 0 : i32
    return %c0_i32, %c0_i32_0 : i32, i32
  }
  func.func @transform_6(%arg0: i32) -> (i32, i32) {
    %c0_i32 = arith.constant 0 : i32
    %c0_i32_0 = arith.constant 0 : i32
    %c0_i32_1 = arith.constant 0 : i32
    return %c0_i32, %c0_i32_0 : i32, i32
  }
  func.func @transform_7(%arg0: i32) -> (i32, i32) {
    %c0_i32 = arith.constant 0 : i32
    %c0_i32_0 = arith.constant 0 : i32
    %c0_i32_1 = arith.constant 0 : i32
    return %c0_i32, %c0_i32_0 : i32, i32
  }
  func.func @transform_8(%arg0: i32) -> (i32, i32, i32) {
    %c0_i32 = arith.constant 0 : i32
    %c0_i32_0 = arith.constant 0 : i32
    %c0_i32_1 = arith.constant 0 : i32
    return %arg0, %c0_i32, %c0_i32_0 : i32, i32, i32
  }
}

</mosaic_0001>

<llo_original>
// kernel: tpu_custom_call.1
$region0: #{tpu_custom_call.1}
  #allocation0 [shape = 'u32[]', space=smem, size = 0x4, offset = 0x4, fixed_abs, tag = 'smem constant byte address 0x4 - core index']
  #allocation1 [shape = 'u32[144,128]{1,0:T(1,128)}', space=vmem, size = 0x12000, scoped, tag = 'internal scratch']
  %s0 = inlined_call_operand.hbm [shape: f32[2,8,8,16], index: 0, kind: input, shape index: {}]
  %s1 = inlined_call_operand.hbm [shape: f32[2,8,8,8], index: 1, kind: input, shape index: {}]
  %s2 = inlined_call_operand.vmem [shape: f32[16,8], index: 2, kind: input, shape index: {}]
  %s3 = inlined_call_operand.vmem [shape: f32[1,8], index: 3, kind: input, shape index: {}]
  %s4 = inlined_call_operand.vmem [shape: f32[4,16], index: 4, kind: input, shape index: {}]
  %s5 = inlined_call_operand.vmem [shape: f32[16,16], index: 5, kind: input, shape index: {}]
  %s6 = inlined_call_operand.vmem [shape: f32[16,2], index: 6, kind: input, shape index: {}]
  %s7 = inlined_call_operand.vmem [shape: f32[1,2], index: 7, kind: input, shape index: {}]
  %s8 = inlined_call_operand.hbm [shape: f32[2,1,2], index: 8, kind: output, shape index: {}]
  %s9 = sld [smem:[#allocation0]]
  $region73: #{tpu_custom_call.1} parent=0
    _
  %s11 = ssub.s32 1, %s9
  %s12 = scalar_select 0, %s11, %s9
  $region1: #{tpu_custom_call.1} parent=0
    #allocation2 [shape = 'u8[65536]{0}', space=vmem, size = 0x10000, scoped, tag = 'input window, operand 0']
    #allocation3 [shape = 's32[2]{0}', space=sflag, size = 0x8, scoped, tag = 'scoped memory for tpu_custom_call.1']
    #allocation4 [shape = 's32[2]{0}', space=sflag, size = 0x8, scoped, tag = 'scoped memory for tpu_custom_call.1']
    #allocation5 [shape = 'u8[65536]{0}', space=vmem, size = 0x10000, scoped, tag = 'input window, operand 1']
    #allocation6 [shape = 's32[2]{0}', space=sflag, size = 0x8, scoped, tag = 'scoped memory for tpu_custom_call.1']
    #allocation7 [shape = 'u8[1024]{0}', space=vmem, size = 0x400, scoped, tag = 'output window, operand 0']
    %13 = vsyncpa [#allocation3], 0
    %s14 = scalar_lea.sflag [#allocation3], 1
    %15 = vsyncpa %s14, 0
    %16 = vsyncpa [#allocation6], 0
    %s17 = scalar_lea.sflag [#allocation6], 1
    %18 = vsyncpa %s17, 0
    %19 = vsyncpa [#allocation4], 0
    %s20 = scalar_lea.sflag [#allocation4], 1
    %21 = vsyncpa %s20, 0
    loop: start=0, step=1, limit=4
    $region2: #{tpu_custom_call.1} parent=1 // loop_pre_header
      _
    $region3: #{tpu_custom_call.1} parent=1 // loop_header
      %s23 = sphi 0, %s27
      %p24 = scmp.ge.s32.totalorder %s23, 4
      %s33 = sphi 0, %s35
      %s36 = sphi 0, %s33
      %s37 = sphi 0, %s36
      %s53 = sphi 0, %s37
      %s59 = sphi 0, %s61
      %s62 = sphi 0, %s59
      %s63 = sphi 0, %s62
      %s79 = sphi 0, %s63
      %s83 = sphi 0, %s83
      %s85 = sphi 0, %s83
      %s86 = sphi 0, %s85
      %s100 = sphi 0, %s86
      %s104 = sphi 0, %s104
      %s106 = sphi 0, %s104
      %s107 = sphi 0, %s106
      %s121 = sphi 0, %s107
      %s125 = sphi 0, %s125
      %s127 = sphi 0, %s125
      %s128 = sphi 0, %s127
      %s142 = sphi 0, %s128
      %s146 = sphi 0, %s146
      %s148 = sphi 0, %s146
      %s149 = sphi 0, %s148
      %s163 = sphi 0, %s149
      %s167 = sphi 0, %s167
      %s169 = sphi 0, %s167
      %s170 = sphi 0, %s169
      %s184 = sphi 0, %s170
      %s188 = sphi 0, %s188
      %s190 = sphi 0, %s188
      %s191 = sphi 0, %s190
      %s205 = sphi 0, %s191
      %s211 = sphi 0, %s213
      %s214 = sphi 0, %s211
      %s215 = sphi 0, %s214
      %s231 = sphi 0, %s215
    $region4: #{tpu_custom_call.1} parent=1 // loop_header_branch
      %26 = sbr.rel (%p24) target = $region8
    $region5: #{tpu_custom_call.1} parent=1 // loop_body
      %s28 = ssub.s32 %s23, 1
      %s29 = ssub.s32 %s23, 2
      %s30 = sadd.s32 %s23, 1
      %s31 = ssub.s32 %s23, %s30
      %p32 = scmp.eq.s32.totalorder %s31, 0
      %s34 = sadd.s32 %s33, 1
      %s35 = scalar_select %p32, %s33, %s34
      %p38 = pneg %p32
      %p39 = scmp.eq.s32.totalorder %s23, 1
      %p40 = por %p38, %p39
      %p41 = scmp.ne.s32.totalorder %s33, %s36
      %p42 = scmp.eq.s32.totalorder %s23, 0
      %p43 = por %p41, %p42
      %p44 = scmp.ne.s32.totalorder %s33, %s36
      %p45 = scmp.eq.s32.totalorder %s28, 1
      %p46 = por %p44, %p45
      %p47 = scmp.ne.s32.totalorder %s36, %s37
      %p48 = scmp.eq.s32.totalorder %s28, 0
      %p49 = por %p47, %p48
      %p50 = scmp.ne.s32.totalorder %s36, %s37
      %p51 = scmp.eq.s32.totalorder %s29, 1
      %p52 = por %p50, %p51
      %p54 = scmp.ne.s32.totalorder %s37, %s53
      %p55 = scmp.eq.s32.totalorder %s29, 0
      %p56 = por %p54, %p55
      %s57 = ssub.s32 %s23, %s30
      %p58 = scmp.eq.s32.totalorder %s57, 0
      %s60 = sadd.s32 %s59, 1
      %s61 = scalar_select %p58, %s59, %s60
      %p64 = pneg %p58
      %p65 = scmp.eq.s32.totalorder %s23, 1
      %p66 = por %p64, %p65
      %p67 = scmp.ne.s32.totalorder %s59, %s62
      %p68 = scmp.eq.s32.totalorder %s23, 0
      %p69 = por %p67, %p68
      %p70 = scmp.ne.s32.totalorder %s59, %s62
      %p71 = scmp.eq.s32.totalorder %s28, 1
      %p72 = por %p70, %p71
      %p73 = scmp.ne.s32.totalorder %s62, %s63
      %p74 = scmp.eq.s32.totalorder %s28, 0
      %p75 = por %p73, %p74
      %p76 = scmp.ne.s32.totalorder %s62, %s63
      %p77 = scmp.eq.s32.totalorder %s29, 1
      %p78 = por %p76, %p77
      %p80 = scmp.ne.s32.totalorder %s63, %s79
      %p81 = scmp.eq.s32.totalorder %s29, 0
      %p82 = por %p80, %p81
      %s84 = sadd.s32 %s83, 1
      %p87 = scmp.eq.s32.totalorder %s23, 1
      %p88 = scmp.ne.s32.totalorder %s83, %s85
      %p89 = scmp.eq.s32.totalorder %s23, 0
      %p90 = por %p88, %p89
      %p91 = scmp.ne.s32.totalorder %s83, %s85
      %p92 = scmp.eq.s32.totalorder %s28, 1
      %p93 = por %p91, %p92
      %p94 = scmp.ne.s32.totalorder %s85, %s86
      %p95 = scmp.eq.s32.totalorder %s28, 0
      %p96 = por %p94, %p95
      %p97 = scmp.ne.s32.totalorder %s85, %s86
      %p98 = scmp.eq.s32.totalorder %s29, 1
      %p99 = por %p97, %p98
      %p101 = scmp.ne.s32.totalorder %s86, %s100
      %p102 = scmp.eq.s32.totalorder %s29, 0
      %p103 = por %p101, %p102
      %s105 = sadd.s32 %s104, 1
      %p108 = scmp.eq.s32.totalorder %s23, 1
      %p109 = scmp.ne.s32.totalorder %s104, %s106
      %p110 = scmp.eq.s32.totalorder %s23, 0
      %p111 = por %p109, %p110
      %p112 = scmp.ne.s32.totalorder %s104, %s106
      %p113 = scmp.eq.s32.totalorder %s28, 1
      %p114 = por %p112, %p113
      %p115 = scmp.ne.s32.totalorder %s106, %s107
      %p116 = scmp.eq.s32.totalorder %s28, 0
      %p117 = por %p115, %p116
      %p118 = scmp.ne.s32.totalorder %s106, %s107
      %p119 = scmp.eq.s32.totalorder %s29, 1
      %p120 = por %p118, %p119
      %p122 = scmp.ne.s32.totalorder %s107, %s121
      %p123 = scmp.eq.s32.totalorder %s29, 0
      %p124 = por %p122, %p123
      %s126 = sadd.s32 %s125, 1
      %p129 = scmp.eq.s32.totalorder %s23, 1
      %p130 = scmp.ne.s32.totalorder %s125, %s127
      %p131 = scmp.eq.s32.totalorder %s23, 0
      %p132 = por %p130, %p131
      %p133 = scmp.ne.s32.totalorder %s125, %s127
      %p134 = scmp.eq.s32.totalorder %s28, 1
      %p135 = por %p133, %p134
      %p136 = scmp.ne.s32.totalorder %s127, %s128
      %p137 = scmp.eq.s32.totalorder %s28, 0
      %p138 = por %p136, %p137
      %p139 = scmp.ne.s32.totalorder %s127, %s128
      %p140 = scmp.eq.s32.totalorder %s29, 1
      %p141 = por %p139, %p140
      %p143 = scmp.ne.s32.totalorder %s128, %s142
      %p144 = scmp.eq.s32.totalorder %s29, 0
      %p145 = por %p143, %p144
      %s147 = sadd.s32 %s146, 1
      %p150 = scmp.eq.s32.totalorder %s23, 1
      %p151 = scmp.ne.s32.totalorder %s146, %s148
      %p152 = scmp.eq.s32.totalorder %s23, 0
      %p153 = por %p151, %p152
      %p154 = scmp.ne.s32.totalorder %s146, %s148
      %p155 = scmp.eq.s32.totalorder %s28, 1
      %p156 = por %p154, %p155
      %p157 = scmp.ne.s32.totalorder %s148, %s149
      %p158 = scmp.eq.s32.totalorder %s28, 0
      %p159 = por %p157, %p158
      %p160 = scmp.ne.s32.totalorder %s148, %s149
      %p161 = scmp.eq.s32.totalorder %s29, 1
      %p162 = por %p160, %p161
      %p164 = scmp.ne.s32.totalorder %s149, %s163
      %p165 = scmp.eq.s32.totalorder %s29, 0
      %p166 = por %p164, %p165
      %s168 = sadd.s32 %s167, 1
      %p171 = scmp.eq.s32.totalorder %s23, 1
      %p172 = scmp.ne.s32.totalorder %s167, %s169
      %p173 = scmp.eq.s32.totalorder %s23, 0
      %p174 = por %p172, %p173
      %p175 = scmp.ne.s32.totalorder %s167, %s169
      %p176 = scmp.eq.s32.totalorder %s28, 1
      %p177 = por %p175, %p176
      %p178 = scmp.ne.s32.totalorder %s169, %s170
      %p179 = scmp.eq.s32.totalorder %s28, 0
      %p180 = por %p178, %p179
      %p181 = scmp.ne.s32.totalorder %s169, %s170
      %p182 = scmp.eq.s32.totalorder %s29, 1
      %p183 = por %p181, %p182
      %p185 = scmp.ne.s32.totalorder %s170, %s184
      %p186 = scmp.eq.s32.totalorder %s29, 0
      %p187 = por %p185, %p186
      %s189 = sadd.s32 %s188, 1
      %p192 = scmp.eq.s32.totalorder %s23, 1
      %p193 = scmp.ne.s32.totalorder %s188, %s190
      %p194 = scmp.eq.s32.totalorder %s23, 0
      %p195 = por %p193, %p194
      %p196 = scmp.ne.s32.totalorder %s188, %s190
      %p197 = scmp.eq.s32.totalorder %s28, 1
      %p198 = por %p196, %p197
      %p199 = scmp.ne.s32.totalorder %s190, %s191
      %p200 = scmp.eq.s32.totalorder %s28, 0
      %p201 = por %p199, %p200
      %p202 = scmp.ne.s32.totalorder %s190, %s191
      %p203 = scmp.eq.s32.totalorder %s29, 1
      %p204 = por %p202, %p203
      %p206 = scmp.ne.s32.totalorder %s191, %s205
      %p207 = scmp.eq.s32.totalorder %s29, 0
      %p208 = por %p206, %p207
      %s209 = ssub.s32 %s23, %s30
      %p210 = scmp.eq.s32.totalorder %s209, 0
      %s212 = sadd.s32 %s211, 1
      %s213 = scalar_select %p210, %s211, %s212
      %p216 = pneg %p210
      %p217 = scmp.eq.s32.totalorder %s23, 1
      %p218 = por %p216, %p217
      %p219 = scmp.ne.s32.totalorder %s211, %s214
      %p220 = scmp.eq.s32.totalorder %s23, 0
      %p221 = por %p219, %p220
      %p222 = scmp.ne.s32.totalorder %s211, %s214
      %p223 = scmp.eq.s32.totalorder %s28, 1
      %p224 = por %p222, %p223
      %p225 = scmp.ne.s32.totalorder %s214, %s215
      %p226 = scmp.eq.s32.totalorder %s28, 0
      %p227 = por %p225, %p226
      %p228 = scmp.ne.s32.totalorder %s214, %s215
      %p229 = scmp.eq.s32.totalorder %s29, 1
      %p230 = por %p228, %p229
      %p232 = scmp.ne.s32.totalorder %s215, %s231
      %p233 = scmp.eq.s32.totalorder %s29, 0
      %p234 = por %p232, %p233
      %p235 = scmp.le.s32.totalorder 1, %s23
      %p236 = scmp.lt.s32.totalorder %s23, 3
      %p237 = pnand %p235, %p236
      %p238 = pneg %p237
      // Predicated region
      $region9: #{tpu_custom_call.1} parent=5 // pred_check
        _
      $region10: #{tpu_custom_call.1} parent=5 // pred_check_branch
        %240 = sbr.rel (%p237) target = $region12
      $region11: #{tpu_custom_call.1} parent=5 // pred_region
        %s241 = ssub.s32 %s23, 1
        // Predicated region
        $region13: #{tpu_custom_call.1} parent=11 // pred_check
          %p242 = pneg %p96
        $region14: #{tpu_custom_call.1} parent=11 // pred_check_branch
          %244 = sbr.rel (%p242) target = $region16
        $region15: #{tpu_custom_call.1} parent=11 // pred_region
          _
        $region16: #{tpu_custom_call.1} parent=11 // pred_fallthru
          _
        // Predicated region
        $region17: #{tpu_custom_call.1} parent=11 // pred_check
          %p245 = pneg %p117
        $region18: #{tpu_custom_call.1} parent=11 // pred_check_branch
          %247 = sbr.rel (%p245) target = $region20
        $region19: #{tpu_custom_call.1} parent=11 // pred_region
          _
        $region20: #{tpu_custom_call.1} parent=11 // pred_fallthru
          _
        // Predicated region
        $region21: #{tpu_custom_call.1} parent=11 // pred_check
          %p248 = pneg %p138
        $region22: #{tpu_custom_call.1} parent=11 // pred_check_branch
          %250 = sbr.rel (%p248) target = $region24
        $region23: #{tpu_custom_call.1} parent=11 // pred_region
          _
        $region24: #{tpu_custom_call.1} parent=11 // pred_fallthru
          _
        // Predicated region
        $region25: #{tpu_custom_call.1} parent=11 // pred_check
          %p251 = pneg %p159
        $region26: #{tpu_custom_call.1} parent=11 // pred_check_branch
          %253 = sbr.rel (%p251) target = $region28
        $region27: #{tpu_custom_call.1} parent=11 // pred_region
          _
        $region28: #{tpu_custom_call.1} parent=11 // pred_fallthru
          _
        // Predicated region
        $region29: #{tpu_custom_call.1} parent=11 // pred_check
          %p254 = pneg %p180
        $region30: #{tpu_custom_call.1} parent=11 // pred_check_branch
          %256 = sbr.rel (%p254) target = $region32
        $region31: #{tpu_custom_call.1} parent=11 // pred_region
          _
        $region32: #{tpu_custom_call.1} parent=11 // pred_fallthru
          _
        // Predicated region
        $region33: #{tpu_custom_call.1} parent=11 // pred_check
          %p257 = pneg %p201
        $region34: #{tpu_custom_call.1} parent=11 // pred_check_branch
          %259 = sbr.rel (%p257) target = $region36
        $region35: #{tpu_custom_call.1} parent=11 // pred_region
          _
        $region36: #{tpu_custom_call.1} parent=11 // pred_fallthru
          _
      $region12: #{tpu_custom_call.1} parent=5 // pred_fallthru
        _
      %p260 = scmp.lt.s32.totalorder %s23, 2
      // Predicated region
      $region37: #{tpu_custom_call.1} parent=5 // pred_check
        %p261 = pneg %p260
      $region38: #{tpu_custom_call.1} parent=5 // pred_check_branch
        %263 = sbr.rel (%p261) target = $region40
      $region39: #{tpu_custom_call.1} parent=5 // pred_region
        // Predicated region
        $region41: #{tpu_custom_call.1} parent=39 // pred_check
          %p264 = pneg %p43
        $region42: #{tpu_custom_call.1} parent=39 // pred_check_branch
          %266 = sbr.rel (%p264) target = $region44
        $region43: #{tpu_custom_call.1} parent=39 // pred_region
          %s267 = sand.u32 %s33, 1
          %s268 = scalar_lea.sflag [#allocation3], %s267
          %s269 = sand.u32 %s33, 1
          %s270 = smul.addr %s269, 64
          %s271 = scalar_lea.vmem [#allocation2], %s270
          %s273 = ssub.s32 1024, 1024
          %274 = vsyncadd %s268, %s273
          %s275 = smul.addr %s23, 8
          %s276 = smul.addr %s275, 128
          %s277 = scalar_lea.hbm %s0, %s276
          %s278 = sshll.u32 %s271, 4
          %s279 = int_to_ptr.vmem [resolvable:$true] %s278
          %284 = dma.hbm_to_vmem [thread:$0]  %s277, 1024, %s279, %s268, 128, 128, 8
        $region44: #{tpu_custom_call.1} parent=39 // pred_fallthru
          _
        // Predicated region
        $region45: #{tpu_custom_call.1} parent=39 // pred_check
          %p285 = pneg %p69
        $region46: #{tpu_custom_call.1} parent=39 // pred_check_branch
          %287 = sbr.rel (%p285) target = $region48
        $region47: #{tpu_custom_call.1} parent=39 // pred_region
          %s288 = sand.u32 %s59, 1
          %s289 = scalar_lea.sflag [#allocation6], %s288
          %s290 = sand.u32 %s59, 1
          %s291 = smul.addr %s290, 64
          %s292 = scalar_lea.vmem [#allocation5], %s291
          %s294 = ssub.s32 1024, 1024
          %295 = vsyncadd %s289, %s294
          %s296 = smul.addr %s23, 8
          %s297 = smul.addr %s296, 128
          %s298 = scalar_lea.hbm %s1, %s297
          %s299 = sshll.u32 %s292, 4
          %s300 = int_to_ptr.vmem [resolvable:$true] %s299
          %305 = dma.hbm_to_vmem [thread:$0]  %s298, 1024, %s300, %s289, 128, 128, 8
        $region48: #{tpu_custom_call.1} parent=39 // pred_fallthru
          _
      $region40: #{tpu_custom_call.1} parent=5 // pred_fallthru
        _
      %p306 = scmp.le.s32.totalorder 1, %s23
      %p307 = scmp.lt.s32.totalorder %s23, 3
      %p308 = pnand %p306, %p307
      %p309 = pneg %p308
      // Predicated region
      $region49: #{tpu_custom_call.1} parent=5 // pred_check
        _
      $region50: #{tpu_custom_call.1} parent=5 // pred_check_branch
        %311 = sbr.rel (%p308) target = $region52
      $region51: #{tpu_custom_call.1} parent=5 // pred_region
        %s312 = ssub.s32 %s23, 1
        %s313 = sand.u32 %s36, 1
        %s314 = scalar_lea.sflag [#allocation3], %s313
        %s315 = sand.u32 %s36, 1
        %s316 = smul.addr %s315, 64
        %s317 = scalar_lea.vmem [#allocation2], %s316
        // Predicated region
        $region53: #{tpu_custom_call.1} parent=51 // pred_check
          %p318 = pneg %p49
        $region54: #{tpu_custom_call.1} parent=51 // pred_check_branch
          %320 = sbr.rel (%p318) target = $region56
        $region55: #{tpu_custom_call.1} parent=51 // pred_region
          %321 = dma.done %s314, 1024
        $region56: #{tpu_custom_call.1} parent=51 // pred_fallthru
          _
        %s322 = sand.u32 %s62, 1
        %s323 = scalar_lea.sflag [#allocation6], %s322
        %s324 = sand.u32 %s62, 1
        %s325 = smul.addr %s324, 64
        %s326 = scalar_lea.vmem [#allocation5], %s325
        // Predicated region
        $region57: #{tpu_custom_call.1} parent=51 // pred_check
          %p327 = pneg %p75
        $region58: #{tpu_custom_call.1} parent=51 // pred_check_branch
          %329 = sbr.rel (%p327) target = $region60
        $region59: #{tpu_custom_call.1} parent=51 // pred_region
          %330 = dma.done %s323, 1024
        $region60: #{tpu_custom_call.1} parent=51 // pred_fallthru
          _
        %s331 = sand.u32 %s36, 1
        %s332 = scalar_lea.sflag [#allocation3], %s331
        %s333 = sand.u32 %s36, 1
        %s334 = smul.addr %s333, 64
        %s335 = scalar_lea.vmem [#allocation2], %s334
        %p336 = pneg %p49
        %p337 = pneg %p46
        %s338 = sand.u32 %s62, 1
        %s339 = scalar_lea.sflag [#allocation6], %s338
        %s340 = sand.u32 %s62, 1
        %s341 = smul.addr %s340, 64
        %s342 = scalar_lea.vmem [#allocation5], %s341
        %p343 = pneg %p75
        %p344 = pneg %p72
        %p345 = pneg %p96
        %p346 = pneg %p93
        %p347 = pneg %p117
        %p348 = pneg %p114
        %p349 = pneg %p138
        %p350 = pneg %p135
        %p351 = pneg %p159
        %p352 = pneg %p156
        %p353 = pneg %p180
        %p354 = pneg %p177
        %p355 = pneg %p201
        %p356 = pneg %p198
        %p357 = pneg %p227
        %p358 = pneg %p224
        %s359 = sand.u32 %s214, 1
        %s360 = scalar_lea.sflag [#allocation4], %s359
        %s361 = sand.u32 %s214, 1
        %s362 = scalar_lea.vmem [#allocation7], %s361
        %v363 = vld [vmem:[%s317] sm:$0xff]
        %v364 = vld [vmem:[%s317 + $0x8] sm:$0xff]
        %v365 = vld [vmem:[%s317 + $0x10] sm:$0xff]
        %v366 = vld [vmem:[%s317 + $0x18] sm:$0xff]
        %v367 = vld [vmem:[%s317 + $0x20] sm:$0xff]
        %v368 = vld [vmem:[%s317 + $0x28] sm:$0xff]
        %v369 = vld [vmem:[%s317 + $0x30] sm:$0xff]
        %v370 = vld [vmem:[%s317 + $0x38] sm:$0xff]
        %v371 = vld [vmem:[%s326] sm:$0xff]
        %v372 = vld [vmem:[%s326 + $0x8] sm:$0xff]
        %v373 = vld [vmem:[%s326 + $0x10] sm:$0xff]
        %v374 = vld [vmem:[%s326 + $0x18] sm:$0xff]
        %v375 = vld [vmem:[%s326 + $0x20] sm:$0xff]
        %v376 = vld [vmem:[%s326 + $0x28] sm:$0xff]
        %v377 = vld [vmem:[%s326 + $0x30] sm:$0xff]
        %v378 = vld [vmem:[%s326 + $0x38] sm:$0xff]
        %vm379 = vcmask 64512
        %v381 = vsel %vm379, %v371, 0
        %383 = vmatprep.subr.mxu0 0.0
        %384 = vmatpush1.msra.mxu0 %v363
        %385 = vmatprep.subr.mxu0 0.0
        %386 = vmatpush1.msra.mxu0 0.0
        %387 = vmatprep.subr.mxu0 0.0
        %388 = vmatpush1.msra.mxu0 0.0
        %389 = vmatprep.subr.mxu0 0.0
        %390 = vmatpush1.msra.mxu0 0.0
        %391 = vmatprep.subr.mxu0 0.0
        %392 = vmatpush1.msra.mxu0 0.0
        %393 = vmatprep.subr.mxu0 0.0
        %394 = vmatpush1.msra.mxu0 0.0
        %395 = vmatprep.subr.mxu0 0.0
        %396 = vmatpush1.msra.mxu0 0.0
        %397 = vmatprep.subr.mxu0 0.0
        %398 = vmatpush1.msra.mxu0 0.0
        %399 = vmatprep.subr.mxu0 0.0
        %400 = vmatpush1.msra.mxu0 0.0
        %401 = vmatprep.subr.mxu0 0.0
        %402 = vmatpush1.msra.mxu0 0.0
        %403 = vmatprep.subr.mxu0 0.0
        %404 = vmatpush1.msra.mxu0 0.0
        %405 = vmatprep.subr.mxu0 0.0
        %406 = vmatpush1.msra.mxu0 0.0
        %407 = vmatprep.subr.mxu0 0.0
        %408 = vmatpush1.msra.mxu0 0.0
        %409 = vmatprep.subr.mxu0 0.0
        %410 = vmatpush1.msra.mxu0 0.0
        %411 = vmatprep.subr.mxu0 0.0
        %412 = vmatpush1.msra.mxu0 0.0
        %413 = vmatprep.subr.mxu0 0.0
        %414 = vmatpush1.msra.mxu0 0.0
        %415 = vmatprep.subr.mxu0 0.0
        %416 = vmatpush1.msra.mxu0 0.0
        %417 = vmatprep.subr.mxu0 0.0
        %418 = vmatpush1.msra.mxu0 0.0
        %419 = vmatprep.subr.mxu0 0.0
        %420 = vmatpush1.msra.mxu0 0.0
        %421 = vmatprep.subr.mxu0 0.0
        %422 = vmatpush1.msra.mxu0 0.0
        %423 = vmatprep.subr.mxu0 0.0
        %424 = vmatpush1.msra.mxu0 0.0
        %425 = vmatprep.subr.mxu0 0.0
        %426 = vmatpush1.msra.mxu0 0.0
        %427 = vmatprep.subr.mxu0 0.0
        %428 = vmatpush1.msra.mxu0 0.0
        %429 = vmatprep.subr.mxu0 0.0
        %430 = vmatpush1.msra.mxu0 0.0
        %431 = vmatprep.subr.mxu0 0.0
        %432 = vmatpush1.msra.mxu0 0.0
        %433 = vmatprep.subr.mxu0 0.0
        %434 = vmatpush1.msra.mxu0 0.0
        %435 = vmatprep.subr.mxu0 0.0
        %436 = vmatpush1.msra.mxu0 0.0
        %437 = vmatprep.subr.mxu0 0.0
        %438 = vmatpush1.msra.mxu0 0.0
        %439 = vmatprep.subr.mxu0 0.0
        %440 = vmatpush1.msra.mxu0 0.0
        %441 = vmatprep.subr.mxu0 0.0
        %442 = vmatpush1.msra.mxu0 0.0
        %443 = vmatprep.subr.mxu0 0.0
        %444 = vmatpush1.msra.mxu0 0.0
        %445 = vmatprep.subr.mxu0 0.0
        %446 = vmatpush1.msra.mxu0 0.0
        %447 = vmatprep.mubr.f32.mxu0 0.0
        %448 = vmatmul.mubr.f32.gmra.mrb[0].mxu0 %v381
        %v449 = vpop.f32.mrb[0].mxu0
        %v450 = vadd.f32 0.0, %v449
        %v451 = vpop.f32.mrb[0].mxu0
        %452 = vdwg.mxu0
        %v454 = vsel %vm379, %v372, 0
        %456 = vmatprep.subr.mxu0 0.0
        %457 = vmatpush1.msra.mxu0 %v364
        %458 = vmatprep.subr.mxu0 0.0
        %459 = vmatpush1.msra.mxu0 0.0
        %460 = vmatprep.subr.mxu0 0.0
        %461 = vmatpush1.msra.mxu0 0.0
        %462 = vmatprep.subr.mxu0 0.0
        %463 = vmatpush1.msra.mxu0 0.0
        %464 = vmatprep.subr.mxu0 0.0
        %465 = vmatpush1.msra.mxu0 0.0
        %466 = vmatprep.subr.mxu0 0.0
        %467 = vmatpush1.msra.mxu0 0.0
        %468 = vmatprep.subr.mxu0 0.0
        %469 = vmatpush1.msra.mxu0 0.0
        %470 = vmatprep.subr.mxu0 0.0
        %471 = vmatpush1.msra.mxu0 0.0
        %472 = vmatprep.subr.mxu0 0.0
        %473 = vmatpush1.msra.mxu0 0.0
        %474 = vmatprep.subr.mxu0 0.0
        %475 = vmatpush1.msra.mxu0 0.0
        %476 = vmatprep.subr.mxu0 0.0
        %477 = vmatpush1.msra.mxu0 0.0
        %478 = vmatprep.subr.mxu0 0.0
        %479 = vmatpush1.msra.mxu0 0.0
        %480 = vmatprep.subr.mxu0 0.0
        %481 = vmatpush1.msra.mxu0 0.0
        %482 = vmatprep.subr.mxu0 0.0
        %483 = vmatpush1.msra.mxu0 0.0
        %484 = vmatprep.subr.mxu0 0.0
        %485 = vmatpush1.msra.mxu0 0.0
        %486 = vmatprep.subr.mxu0 0.0
        %487 = vmatpush1.msra.mxu0 0.0
        %488 = vmatprep.subr.mxu0 0.0
        %489 = vmatpush1.msra.mxu0 0.0
        %490 = vmatprep.subr.mxu0 0.0
        %491 = vmatpush1.msra.mxu0 0.0
        %492 = vmatprep.subr.mxu0 0.0
        %493 = vmatpush1.msra.mxu0 0.0
        %494 = vmatprep.subr.mxu0 0.0
        %495 = vmatpush1.msra.mxu0 0.0
        %496 = vmatprep.subr.mxu0 0.0
        %497 = vmatpush1.msra.mxu0 0.0
        %498 = vmatprep.subr.mxu0 0.0
        %499 = vmatpush1.msra.mxu0 0.0
        %500 = vmatprep.subr.mxu0 0.0
        %501 = vmatpush1.msra.mxu0 0.0
        %502 = vmatprep.subr.mxu0 0.0
        %503 = vmatpush1.msra.mxu0 0.0
        %504 = vmatprep.subr.mxu0 0.0
        %505 = vmatpush1.msra.mxu0 0.0
        %506 = vmatprep.subr.mxu0 0.0
        %507 = vmatpush1.msra.mxu0 0.0
        %508 = vmatprep.subr.mxu0 0.0
        %509 = vmatpush1.msra.mxu0 0.0
        %510 = vmatprep.subr.mxu0 0.0
        %511 = vmatpush1.msra.mxu0 0.0
        %512 = vmatprep.subr.mxu0 0.0
        %513 = vmatpush1.msra.mxu0 0.0
        %514 = vmatprep.subr.mxu0 0.0
        %515 = vmatpush1.msra.mxu0 0.0
        %516 = vmatprep.subr.mxu0 0.0
        %517 = vmatpush1.msra.mxu0 0.0
        %518 = vmatprep.subr.mxu0 0.0
        %519 = vmatpush1.msra.mxu0 0.0
        %520 = vmatprep.mubr.f32.mxu0 0.0
        %521 = vmatmul.mubr.f32.gmra.mrb[0].mxu0 %v454
        %v522 = vpop.f32.mrb[0].mxu0
        %v523 = vadd.f32 0.0, %v522
        %v524 = vpop.f32.mrb[0].mxu0
        %525 = vdwg.mxu0
        %v527 = vsel %vm379, %v373, 0
        %529 = vmatprep.subr.mxu0 0.0
        %530 = vmatpush1.msra.mxu0 %v365
        %531 = vmatprep.subr.mxu0 0.0
        %532 = vmatpush1.msra.mxu0 0.0
        %533 = vmatprep.subr.mxu0 0.0
        %534 = vmatpush1.msra.mxu0 0.0
        %535 = vmatprep.subr.mxu0 0.0
        %536 = vmatpush1.msra.mxu0 0.0
        %537 = vmatprep.subr.mxu0 0.0
        %538 = vmatpush1.msra.mxu0 0.0
        %539 = vmatprep.subr.mxu0 0.0
        %540 = vmatpush1.msra.mxu0 0.0
        %541 = vmatprep.subr.mxu0 0.0
        %542 = vmatpush1.msra.mxu0 0.0
        %543 = vmatprep.subr.mxu0 0.0
        %544 = vmatpush1.msra.mxu0 0.0
        %545 = vmatprep.subr.mxu0 0.0
        %546 = vmatpush1.msra.mxu0 0.0
        %547 = vmatprep.subr.mxu0 0.0
        %548 = vmatpush1.msra.mxu0 0.0
        %549 = vmatprep.subr.mxu0 0.0
        %550 = vmatpush1.msra.mxu0 0.0
        %551 = vmatprep.subr.mxu0 0.0
        %552 = vmatpush1.msra.mxu0 0.0
        %553 = vmatprep.subr.mxu0 0.0
        %554 = vmatpush1.msra.mxu0 0.0
        %555 = vmatprep.subr.mxu0 0.0
        %556 = vmatpush1.msra.mxu0 0.0
        %557 = vmatprep.subr.mxu0 0.0
        %558 = vmatpush1.msra.mxu0 0.0
        %559 = vmatprep.subr.mxu0 0.0
        %560 = vmatpush1.msra.mxu0 0.0
        %561 = vmatprep.subr.mxu0 0.0
        %562 = vmatpush1.msra.mxu0 0.0
        %563 = vmatprep.subr.mxu0 0.0
        %564 = vmatpush1.msra.mxu0 0.0
        %565 = vmatprep.subr.mxu0 0.0
        %566 = vmatpush1.msra.mxu0 0.0
        %567 = vmatprep.subr.mxu0 0.0
        %568 = vmatpush1.msra.mxu0 0.0
        %569 = vmatprep.subr.mxu0 0.0
        %570 = vmatpush1.msra.mxu0 0.0
        %571 = vmatprep.subr.mxu0 0.0
        %572 = vmatpush1.msra.mxu0 0.0
        %573 = vmatprep.subr.mxu0 0.0
        %574 = vmatpush1.msra.mxu0 0.0
        %575 = vmatprep.subr.mxu0 0.0
        %576 = vmatpush1.msra.mxu0 0.0
        %577 = vmatprep.subr.mxu0 0.0
        %578 = vmatpush1.msra.mxu0 0.0
        %579 = vmatprep.subr.mxu0 0.0
        %580 = vmatpush1.msra.mxu0 0.0
        %581 = vmatprep.subr.mxu0 0.0
        %582 = vmatpush1.msra.mxu0 0.0
        %583 = vmatprep.subr.mxu0 0.0
        %584 = vmatpush1.msra.mxu0 0.0
        %585 = vmatprep.subr.mxu0 0.0
        %586 = vmatpush1.msra.mxu0 0.0
        %587 = vmatprep.subr.mxu0 0.0
        %588 = vmatpush1.msra.mxu0 0.0
        %589 = vmatprep.subr.mxu0 0.0
        %590 = vmatpush1.msra.mxu0 0.0
        %591 = vmatprep.subr.mxu0 0.0
        %592 = vmatpush1.msra.mxu0 0.0
        %593 = vmatprep.mubr.f32.mxu0 0.0
        %594 = vmatmul.mubr.f32.gmra.mrb[0].mxu0 %v527
        %v595 = vpop.f32.mrb[0].mxu0
        %v596 = vadd.f32 0.0, %v595
        %v597 = vpop.f32.mrb[0].mxu0
        %598 = vdwg.mxu0
        %v600 = vsel %vm379, %v374, 0
        %602 = vmatprep.subr.mxu0 0.0
        %603 = vmatpush1.msra.mxu0 %v366
        %604 = vmatprep.subr.mxu0 0.0
        %605 = vmatpush1.msra.mxu0 0.0
        %606 = vmatprep.subr.mxu0 0.0
        %607 = vmatpush1.msra.mxu0 0.0
        %608 = vmatprep.subr.mxu0 0.0
        %609 = vmatpush1.msra.mxu0 0.0
        %610 = vmatprep.subr.mxu0 0.0
        %611 = vmatpush1.msra.mxu0 0.0
        %612 = vmatprep.subr.mxu0 0.0
        %613 = vmatpush1.msra.mxu0 0.0
        %614 = vmatprep.subr.mxu0 0.0
        %615 = vmatpush1.msra.mxu0 0.0
        %616 = vmatprep.subr.mxu0 0.0
        %617 = vmatpush1.msra.mxu0 0.0
        %618 = vmatprep.subr.mxu0 0.0
        %619 = vmatpush1.msra.mxu0 0.0
        %620 = vmatprep.subr.mxu0 0.0
        %621 = vmatpush1.msra.mxu0 0.0
        %622 = vmatprep.subr.mxu0 0.0
        %623 = vmatpush1.msra.mxu0 0.0
        %624 = vmatprep.subr.mxu0 0.0
        %625 = vmatpush1.msra.mxu0 0.0
        %626 = vmatprep.subr.mxu0 0.0
        %627 = vmatpush1.msra.mxu0 0.0
        %628 = vmatprep.subr.mxu0 0.0
        %629 = vmatpush1.msra.mxu0 0.0
        %630 = vmatprep.subr.mxu0 0.0
        %631 = vmatpush1.msra.mxu0 0.0
        %632 = vmatprep.subr.mxu0 0.0
        %633 = vmatpush1.msra.mxu0 0.0
        %634 = vmatprep.subr.mxu0 0.0
        %635 = vmatpush1.msra.mxu0 0.0
        %636 = vmatprep.subr.mxu0 0.0
        %637 = vmatpush1.msra.mxu0 0.0
        %638 = vmatprep.subr.mxu0 0.0
        %639 = vmatpush1.msra.mxu0 0.0
        %640 = vmatprep.subr.mxu0 0.0
        %641 = vmatpush1.msra.mxu0 0.0
        %642 = vmatprep.subr.mxu0 0.0
        %643 = vmatpush1.msra.mxu0 0.0
        %644 = vmatprep.subr.mxu0 0.0
        %645 = vmatpush1.msra.mxu0 0.0
        %646 = vmatprep.subr.mxu0 0.0
        %647 = vmatpush1.msra.mxu0 0.0
        %648 = vmatprep.subr.mxu0 0.0
        %649 = vmatpush1.msra.mxu0 0.0
        %650 = vmatprep.subr.mxu0 0.0
        %651 = vmatpush1.msra.mxu0 0.0
        %652 = vmatprep.subr.mxu0 0.0
        %653 = vmatpush1.msra.mxu0 0.0
        %654 = vmatprep.subr.mxu0 0.0
        %655 = vmatpush1.msra.mxu0 0.0
        %656 = vmatprep.subr.mxu0 0.0
        %657 = vmatpush1.msra.mxu0 0.0
        %658 = vmatprep.subr.mxu0 0.0
        %659 = vmatpush1.msra.mxu0 0.0
        %660 = vmatprep.subr.mxu0 0.0
        %661 = vmatpush1.msra.mxu0 0.0
        %662 = vmatprep.subr.mxu0 0.0
        %663 = vmatpush1.msra.mxu0 0.0
        %664 = vmatprep.subr.mxu0 0.0
        %665 = vmatpush1.msra.mxu0 0.0
        %666 = vmatprep.mubr.f32.mxu0 0.0
        %667 = vmatmul.mubr.f32.gmra.mrb[0].mxu0 %v600
        %v668 = vpop.f32.mrb[0].mxu0
        %v669 = vadd.f32 0.0, %v668
        %v670 = vpop.f32.mrb[0].mxu0
        %671 = vdwg.mxu0
        %v673 = vsel %vm379, %v375, 0
        %675 = vmatprep.subr.mxu0 0.0
        %676 = vmatpush1.msra.mxu0 %v367
        %677 = vmatprep.subr.mxu0 0.0
        %678 = vmatpush1.msra.mxu0 0.0
        %679 = vmatprep.subr.mxu0 0.0
        %680 = vmatpush1.msra.mxu0 0.0
        %681 = vmatprep.subr.mxu0 0.0
        %682 = vmatpush1.msra.mxu0 0.0
        %683 = vmatprep.subr.mxu0 0.0
        %684 = vmatpush1.msra.mxu0 0.0
        %685 = vmatprep.subr.mxu0 0.0
        %686 = vmatpush1.msra.mxu0 0.0
        %687 = vmatprep.subr.mxu0 0.0
        %688 = vmatpush1.msra.mxu0 0.0
        %689 = vmatprep.subr.mxu0 0.0
        %690 = vmatpush1.msra.mxu0 0.0
        %691 = vmatprep.subr.mxu0 0.0
        %692 = vmatpush1.msra.mxu0 0.0
        %693 = vmatprep.subr.mxu0 0.0
        %694 = vmatpush1.msra.mxu0 0.0
        %695 = vmatprep.subr.mxu0 0.0
        %696 = vmatpush1.msra.mxu0 0.0
        %697 = vmatprep.subr.mxu0 0.0
        %698 = vmatpush1.msra.mxu0 0.0
        %699 = vmatprep.subr.mxu0 0.0
        %700 = vmatpush1.msra.mxu0 0.0
        %701 = vmatprep.subr.mxu0 0.0
        %702 = vmatpush1.msra.mxu0 0.0
        %703 = vmatprep.subr.mxu0 0.0
        %704 = vmatpush1.msra.mxu0 0.0
        %705 = vmatprep.subr.mxu0 0.0
        %706 = vmatpush1.msra.mxu0 0.0
        %707 = vmatprep.subr.mxu0 0.0
        %708 = vmatpush1.msra.mxu0 0.0
        %709 = vmatprep.subr.mxu0 0.0
        %710 = vmatpush1.msra.mxu0 0.0
        %711 = vmatprep.subr.mxu0 0.0
        %712 = vmatpush1.msra.mxu0 0.0
        %713 = vmatprep.subr.mxu0 0.0
        %714 = vmatpush1.msra.mxu0 0.0
        %715 = vmatprep.subr.mxu0 0.0
        %716 = vmatpush1.msra.mxu0 0.0
        %717 = vmatprep.subr.mxu0 0.0
        %718 = vmatpush1.msra.mxu0 0.0
        %719 = vmatprep.subr.mxu0 0.0
        %720 = vmatpush1.msra.mxu0 0.0
        %721 = vmatprep.subr.mxu0 0.0
        %722 = vmatpush1.msra.mxu0 0.0
        %723 = vmatprep.subr.mxu0 0.0
        %724 = vmatpush1.msra.mxu0 0.0
        %725 = vmatprep.subr.mxu0 0.0
        %726 = vmatpush1.msra.mxu0 0.0
        %727 = vmatprep.subr.mxu0 0.0
        %728 = vmatpush1.msra.mxu0 0.0
        %729 = vmatprep.subr.mxu0 0.0
        %730 = vmatpush1.msra.mxu0 0.0
        %731 = vmatprep.subr.mxu0 0.0
        %732 = vmatpush1.msra.mxu0 0.0
        %733 = vmatprep.subr.mxu0 0.0
        %734 = vmatpush1.msra.mxu0 0.0
        %735 = vmatprep.subr.mxu0 0.0
        %736 = vmatpush1.msra.mxu0 0.0
        %737 = vmatprep.subr.mxu0 0.0
        %738 = vmatpush1.msra.mxu0 0.0
        %739 = vmatprep.mubr.f32.mxu0 0.0
        %740 = vmatmul.mubr.f32.gmra.mrb[0].mxu0 %v673
        %v741 = vpop.f32.mrb[0].mxu0
        %v742 = vadd.f32 0.0, %v741
        %v743 = vpop.f32.mrb[0].mxu0
        %744 = vdwg.mxu0
        %v746 = vsel %vm379, %v376, 0
        %748 = vmatprep.subr.mxu0 0.0
        %749 = vmatpush1.msra.mxu0 %v368
        %750 = vmatprep.subr.mxu0 0.0
        %751 = vmatpush1.msra.mxu0 0.0
        %752 = vmatprep.subr.mxu0 0.0
        %753 = vmatpush1.msra.mxu0 0.0
        %754 = vmatprep.subr.mxu0 0.0
        %755 = vmatpush1.msra.mxu0 0.0
        %756 = vmatprep.subr.mxu0 0.0
        %757 = vmatpush1.msra.mxu0 0.0
        %758 = vmatprep.subr.mxu0 0.0
        %759 = vmatpush1.msra.mxu0 0.0
        %760 = vmatprep.subr.mxu0 0.0
        %761 = vmatpush1.msra.mxu0 0.0
        %762 = vmatprep.subr.mxu0 0.0
        %763 = vmatpush1.msra.mxu0 0.0
        %764 = vmatprep.subr.mxu0 0.0
        %765 = vmatpush1.msra.mxu0 0.0
        %766 = vmatprep.subr.mxu0 0.0
        %767 = vmatpush1.msra.mxu0 0.0
        %768 = vmatprep.subr.mxu0 0.0
        %769 = vmatpush1.msra.mxu0 0.0
        %770 = vmatprep.subr.mxu0 0.0
        %771 = vmatpush1.msra.mxu0 0.0
        %772 = vmatprep.subr.mxu0 0.0
        %773 = vmatpush1.msra.mxu0 0.0
        %774 = vmatprep.subr.mxu0 0.0
        %775 = vmatpush1.msra.mxu0 0.0
        %776 = vmatprep.subr.mxu0 0.0
        %777 = vmatpush1.msra.mxu0 0.0
        %778 = vmatprep.subr.mxu0 0.0
        %779 = vmatpush1.msra.mxu0 0.0
        %780 = vmatprep.subr.mxu0 0.0
        %781 = vmatpush1.msra.mxu0 0.0
        %782 = vmatprep.subr.mxu0 0.0
        %783 = vmatpush1.msra.mxu0 0.0
        %784 = vmatprep.subr.mxu0 0.0
        %785 = vmatpush1.msra.mxu0 0.0
        %786 = vmatprep.subr.mxu0 0.0
        %787 = vmatpush1.msra.mxu0 0.0
        %788 = vmatprep.subr.mxu0 0.0
        %789 = vmatpush1.msra.mxu0 0.0
        %790 = vmatprep.subr.mxu0 0.0
        %791 = vmatpush1.msra.mxu0 0.0
        %792 = vmatprep.subr.mxu0 0.0
        %793 = vmatpush1.msra.mxu0 0.0
        %794 = vmatprep.subr.mxu0 0.0
        %795 = vmatpush1.msra.mxu0 0.0
        %796 = vmatprep.subr.mxu0 0.0
        %797 = vmatpush1.msra.mxu0 0.0
        %798 = vmatprep.subr.mxu0 0.0
        %799 = vmatpush1.msra.mxu0 0.0
        %800 = vmatprep.subr.mxu0 0.0
        %801 = vmatpush1.msra.mxu0 0.0
        %802 = vmatprep.subr.mxu0 0.0
        %803 = vmatpush1.msra.mxu0 0.0
        %804 = vmatprep.subr.mxu0 0.0
        %805 = vmatpush1.msra.mxu0 0.0
        %806 = vmatprep.subr.mxu0 0.0
        %807 = vmatpush1.msra.mxu0 0.0
        %808 = vmatprep.subr.mxu0 0.0
        %809 = vmatpush1.msra.mxu0 0.0
        %810 = vmatprep.subr.mxu0 0.0
        %811 = vmatpush1.msra.mxu0 0.0
        %812 = vmatprep.mubr.f32.mxu0 0.0
        %813 = vmatmul.mubr.f32.gmra.mrb[0].mxu0 %v746
        %v814 = vpop.f32.mrb[0].mxu0
        %v815 = vadd.f32 0.0, %v814
        %v816 = vpop.f32.mrb[0].mxu0
        %817 = vdwg.mxu0
        %v819 = vsel %vm379, %v377, 0
        %821 = vmatprep.subr.mxu0 0.0
        %822 = vmatpush1.msra.mxu0 %v369
        %823 = vmatprep.subr.mxu0 0.0
        %824 = vmatpush1.msra.mxu0 0.0
        %825 = vmatprep.subr.mxu0 0.0
        %826 = vmatpush1.msra.mxu0 0.0
        %827 = vmatprep.subr.mxu0 0.0
        %828 = vmatpush1.msra.mxu0 0.0
        %829 = vmatprep.subr.mxu0 0.0
        %830 = vmatpush1.msra.mxu0 0.0
        %831 = vmatprep.subr.mxu0 0.0
        %832 = vmatpush1.msra.mxu0 0.0
        %833 = vmatprep.subr.mxu0 0.0
        %834 = vmatpush1.msra.mxu0 0.0
        %835 = vmatprep.subr.mxu0 0.0
        %836 = vmatpush1.msra.mxu0 0.0
        %837 = vmatprep.subr.mxu0 0.0
        %838 = vmatpush1.msra.mxu0 0.0
        %839 = vmatprep.subr.mxu0 0.0
        %840 = vmatpush1.msra.mxu0 0.0
        %841 = vmatprep.subr.mxu0 0.0
        %842 = vmatpush1.msra.mxu0 0.0
        %843 = vmatprep.subr.mxu0 0.0
        %844 = vmatpush1.msra.mxu0 0.0
        %845 = vmatprep.subr.mxu0 0.0
        %846 = vmatpush1.msra.mxu0 0.0
        %847 = vmatprep.subr.mxu0 0.0
        %848 = vmatpush1.msra.mxu0 0.0
        %849 = vmatprep.subr.mxu0 0.0
        %850 = vmatpush1.msra.mxu0 0.0
        %851 = vmatprep.subr.mxu0 0.0
        %852 = vmatpush1.msra.mxu0 0.0
        %853 = vmatprep.subr.mxu0 0.0
        %854 = vmatpush1.msra.mxu0 0.0
        %855 = vmatprep.subr.mxu0 0.0
        %856 = vmatpush1.msra.mxu0 0.0
        %857 = vmatprep.subr.mxu0 0.0
        %858 = vmatpush1.msra.mxu0 0.0
        %859 = vmatprep.subr.mxu0 0.0
        %860 = vmatpush1.msra.mxu0 0.0
        %861 = vmatprep.subr.mxu0 0.0
        %862 = vmatpush1.msra.mxu0 0.0
        %863 = vmatprep.subr.mxu0 0.0
        %864 = vmatpush1.msra.mxu0 0.0
        %865 = vmatprep.subr.mxu0 0.0
        %866 = vmatpush1.msra.mxu0 0.0
        %867 = vmatprep.subr.mxu0 0.0
        %868 = vmatpush1.msra.mxu0 0.0
        %869 = vmatprep.subr.mxu0 0.0
        %870 = vmatpush1.msra.mxu0 0.0
        %871 = vmatprep.subr.mxu0 0.0
        %872 = vmatpush1.msra.mxu0 0.0
        %873 = vmatprep.subr.mxu0 0.0
        %874 = vmatpush1.msra.mxu0 0.0
        %875 = vmatprep.subr.mxu0 0.0
        %876 = vmatpush1.msra.mxu0 0.0
        %877 = vmatprep.subr.mxu0 0.0
        %878 = vmatpush1.msra.mxu0 0.0
        %879 = vmatprep.subr.mxu0 0.0
        %880 = vmatpush1.msra.mxu0 0.0
        %881 = vmatprep.subr.mxu0 0.0
        %882 = vmatpush1.msra.mxu0 0.0
        %883 = vmatprep.subr.mxu0 0.0
        %884 = vmatpush1.msra.mxu0 0.0
        %885 = vmatprep.mubr.f32.mxu0 0.0
        %886 = vmatmul.mubr.f32.gmra.mrb[0].mxu0 %v819
        %v887 = vpop.f32.mrb[0].mxu0
        %v888 = vadd.f32 0.0, %v887
        %v889 = vpop.f32.mrb[0].mxu0
        %890 = vdwg.mxu0
        %v892 = vsel %vm379, %v378, 0
        %894 = vmatprep.subr.mxu0 0.0
        %895 = vmatpush1.msra.mxu0 %v370
        %896 = vmatprep.subr.mxu0 0.0
        %897 = vmatpush1.msra.mxu0 0.0
        %898 = vmatprep.subr.mxu0 0.0
        %899 = vmatpush1.msra.mxu0 0.0
        %900 = vmatprep.subr.mxu0 0.0
        %901 = vmatpush1.msra.mxu0 0.0
        %902 = vmatprep.subr.mxu0 0.0
        %903 = vmatpush1.msra.mxu0 0.0
        %904 = vmatprep.subr.mxu0 0.0
        %905 = vmatpush1.msra.mxu0 0.0
        %906 = vmatprep.subr.mxu0 0.0
        %907 = vmatpush1.msra.mxu0 0.0
        %908 = vmatprep.subr.mxu0 0.0
        %909 = vmatpush1.msra.mxu0 0.0
        %910 = vmatprep.subr.mxu0 0.0
        %911 = vmatpush1.msra.mxu0 0.0
        %912 = vmatprep.subr.mxu0 0.0
        %913 = vmatpush1.msra.mxu0 0.0
        %914 = vmatprep.subr.mxu0 0.0
        %915 = vmatpush1.msra.mxu0 0.0
        %916 = vmatprep.subr.mxu0 0.0
        %917 = vmatpush1.msra.mxu0 0.0
        %918 = vmatprep.subr.mxu0 0.0
        %919 = vmatpush1.msra.mxu0 0.0
        %920 = vmatprep.subr.mxu0 0.0
        %921 = vmatpush1.msra.mxu0 0.0
        %922 = vmatprep.subr.mxu0 0.0
        %923 = vmatpush1.msra.mxu0 0.0
        %924 = vmatprep.subr.mxu0 0.0
        %925 = vmatpush1.msra.mxu0 0.0
        %926 = vmatprep.subr.mxu0 0.0
        %927 = vmatpush1.msra.mxu0 0.0
        %928 = vmatprep.subr.mxu0 0.0
        %929 = vmatpush1.msra.mxu0 0.0
        %930 = vmatprep.subr.mxu0 0.0
        %931 = vmatpush1.msra.mxu0 0.0
        %932 = vmatprep.subr.mxu0 0.0
        %933 = vmatpush1.msra.mxu0 0.0
        %934 = vmatprep.subr.mxu0 0.0
        %935 = vmatpush1.msra.mxu0 0.0
        %936 = vmatprep.subr.mxu0 0.0
        %937 = vmatpush1.msra.mxu0 0.0
        %938 = vmatprep.subr.mxu0 0.0
        %939 = vmatpush1.msra.mxu0 0.0
        %940 = vmatprep.subr.mxu0 0.0
        %941 = vmatpush1.msra.mxu0 0.0
        %942 = vmatprep.subr.mxu0 0.0
        %943 = vmatpush1.msra.mxu0 0.0
        %944 = vmatprep.subr.mxu0 0.0
        %945 = vmatpush1.msra.mxu0 0.0
        %946 = vmatprep.subr.mxu0 0.0
        %947 = vmatpush1.msra.mxu0 0.0
        %948 = vmatprep.subr.mxu0 0.0
        %949 = vmatpush1.msra.mxu0 0.0
        %950 = vmatprep.subr.mxu0 0.0
        %951 = vmatpush1.msra.mxu0 0.0
        %952 = vmatprep.subr.mxu0 0.0
        %953 = vmatpush1.msra.mxu0 0.0
        %954 = vmatprep.subr.mxu0 0.0
        %955 = vmatpush1.msra.mxu0 0.0
        %956 = vmatprep.subr.mxu0 0.0
        %957 = vmatpush1.msra.mxu0 0.0
        %958 = vmatprep.mubr.f32.mxu0 0.0
        %959 = vmatmul.mubr.f32.gmra.mrb[0].mxu0 %v892
        %v960 = vpop.f32.mrb[0].mxu0
        %v961 = vadd.f32 0.0, %v960
        %v962 = vpop.f32.mrb[0].mxu0
        %963 = vdwg.mxu0
        %v964 = vld [vmem:[%s2] sm:$0xff]
        %v965 = vld [vmem:[%s2 + $0x8] sm:$0xff]
        %v966 = vld [vmem:[%s3] sm:$0x1]
        %v968 = vlaneseq
        %v969 = vshrl.u32 %v968, 7
        %v970 = vsub.s32 0, %v969
        %v971 = vrot.slane %v966, %v970
        %vm973 = vcmask 130048
        %v975 = vsel %vm973, %v450, 0
        %v978 = vsel %vm973, %v523, 0
        %v981 = vsel %vm973, %v596, 0
        %v984 = vsel %vm973, %v669, 0
        %v987 = vsel %vm973, %v742, 0
        %v990 = vsel %vm973, %v815, 0
        %v993 = vsel %vm973, %v888, 0
        %v996 = vsel %vm973, %v961, 0
        %998 = vmatprep.subr.mxu0 0.0
        %999 = vmatpush1.msra.mxu0 %v964
        %1000 = vmatprep.subr.mxu0 0.0
        %1001 = vmatpush1.msra.mxu0 %v965
        %1002 = vmatprep.subr.mxu0 0.0
        %1003 = vmatpush1.msra.mxu0 0.0
        %1004 = vmatprep.subr.mxu0 0.0
        %1005 = vmatpush1.msra.mxu0 0.0
        %1006 = vmatprep.subr.mxu0 0.0
        %1007 = vmatpush1.msra.mxu0 0.0
        %1008 = vmatprep.subr.mxu0 0.0
        %1009 = vmatpush1.msra.mxu0 0.0
        %1010 = vmatprep.subr.mxu0 0.0
        %1011 = vmatpush1.msra.mxu0 0.0
        %1012 = vmatprep.subr.mxu0 0.0
        %1013 = vmatpush1.msra.mxu0 0.0
        %1014 = vmatprep.subr.mxu0 0.0
        %1015 = vmatpush1.msra.mxu0 0.0
        %1016 = vmatprep.subr.mxu0 0.0
        %1017 = vmatpush1.msra.mxu0 0.0
        %1018 = vmatprep.subr.mxu0 0.0
        %1019 = vmatpush1.msra.mxu0 0.0
        %1020 = vmatprep.subr.mxu0 0.0
        %1021 = vmatpush1.msra.mxu0 0.0
        %1022 = vmatprep.subr.mxu0 0.0
        %1023 = vmatpush1.msra.mxu0 0.0
        %1024 = vmatprep.subr.mxu0 0.0
        %1025 = vmatpush1.msra.mxu0 0.0
        %1026 = vmatprep.subr.mxu0 0.0
        %1027 = vmatpush1.msra.mxu0 0.0
        %1028 = vmatprep.subr.mxu0 0.0
        %1029 = vmatpush1.msra.mxu0 0.0
        %1030 = vmatprep.subr.mxu0 0.0
        %1031 = vmatpush1.msra.mxu0 0.0
        %1032 = vmatprep.subr.mxu0 0.0
        %1033 = vmatpush1.msra.mxu0 0.0
        %1034 = vmatprep.subr.mxu0 0.0
        %1035 = vmatpush1.msra.mxu0 0.0
        %1036 = vmatprep.subr.mxu0 0.0
        %1037 = vmatpush1.msra.mxu0 0.0
        %1038 = vmatprep.subr.mxu0 0.0
        %1039 = vmatpush1.msra.mxu0 0.0
        %1040 = vmatprep.subr.mxu0 0.0
        %1041 = vmatpush1.msra.mxu0 0.0
        %1042 = vmatprep.subr.mxu0 0.0
        %1043 = vmatpush1.msra.mxu0 0.0
        %1044 = vmatprep.subr.mxu0 0.0
        %1045 = vmatpush1.msra.mxu0 0.0
        %1046 = vmatprep.subr.mxu0 0.0
        %1047 = vmatpush1.msra.mxu0 0.0
        %1048 = vmatprep.subr.mxu0 0.0
        %1049 = vmatpush1.msra.mxu0 0.0
        %1050 = vmatprep.subr.mxu0 0.0
        %1051 = vmatpush1.msra.mxu0 0.0
        %1052 = vmatprep.subr.mxu0 0.0
        %1053 = vmatpush1.msra.mxu0 0.0
        %1054 = vmatprep.subr.mxu0 0.0
        %1055 = vmatpush1.msra.mxu0 0.0
        %1056 = vmatprep.subr.mxu0 0.0
        %1057 = vmatpush1.msra.mxu0 0.0
        %1058 = vmatprep.subr.mxu0 0.0
        %1059 = vmatpush1.msra.mxu0 0.0
        %1060 = vmatprep.subr.mxu0 0.0
        %1061 = vmatpush1.msra.mxu0 0.0
        %1062 = vmatprep.mubr.f32.mxu0 0.0
        %1063 = vmatmul.mubr.f32.gmra.mrb[0].mxu0 %v975
        %v1064 = vpop.f32.mrb[0].mxu0
        %v1065 = vadd.f32 %v971, %v1064
        %v1066 = vpop.f32.mrb[0].mxu0
        %1067 = vmatprep.mubr.f32.mxu0 0.0
        %1068 = vmatmul.mubr.f32.gmra.mrb[0].mxu0 %v978
        %v1069 = vpop.f32.mrb[0].mxu0
        %v1070 = vadd.f32 %v971, %v1069
        %v1071 = vpop.f32.mrb[0].mxu0
        %1072 = vmatprep.mubr.f32.mxu0 0.0
        %1073 = vmatmul.mubr.f32.gmra.mrb[0].mxu0 %v981
        %v1074 = vpop.f32.mrb[0].mxu0
        %v1075 = vadd.f32 %v971, %v1074
        %v1076 = vpop.f32.mrb[0].mxu0
        %1077 = vmatprep.mubr.f32.mxu0 0.0
        %1078 = vmatmul.mubr.f32.gmra.mrb[0].mxu0 %v984
        %v1079 = vpop.f32.mrb[0].mxu0
        %v1080 = vadd.f32 %v971, %v1079
        %v1081 = vpop.f32.mrb[0].mxu0
        %1082 = vmatprep.mubr.f32.mxu0 0.0
        %1083 = vmatmul.mubr.f32.gmra.mrb[0].mxu0 %v987
        %v1084 = vpop.f32.mrb[0].mxu0
        %v1085 = vadd.f32 %v971, %v1084
        %v1086 = vpop.f32.mrb[0].mxu0
        %1087 = vmatprep.mubr.f32.mxu0 0.0
        %1088 = vmatmul.mubr.f32.gmra.mrb[0].mxu0 %v990
        %v1089 = vpop.f32.mrb[0].mxu0
        %v1090 = vadd.f32 %v971, %v1089
        %v1091 = vpop.f32.mrb[0].mxu0
        %1092 = vmatprep.mubr.f32.mxu0 0.0
        %1093 = vmatmul.mubr.f32.gmra.mrb[0].mxu0 %v993
        %v1094 = vpop.f32.mrb[0].mxu0
        %v1095 = vadd.f32 %v971, %v1094
        %v1096 = vpop.f32.mrb[0].mxu0
        %1097 = vmatprep.mubr.f32.mxu0 0.0
        %1098 = vmatmul.mubr.f32.gmra.mrb[0].mxu0 %v996
        %v1099 = vpop.f32.mrb[0].mxu0
        %v1100 = vadd.f32 %v971, %v1099
        %v1101 = vpop.f32.mrb[0].mxu0
        %1102 = vdwg.mxu0
        %v1103 = vmax.f32 %v1065, 0.0
        %v1104 = vmax.f32 %v1070, 0.0
        %v1105 = vmax.f32 %v1075, 0.0
        %v1106 = vmax.f32 %v1080, 0.0
        %v1107 = vmax.f32 %v1085, 0.0
        %v1108 = vmax.f32 %v1090, 0.0
        %v1109 = vmax.f32 %v1095, 0.0
        %v1110 = vmax.f32 %v1100, 0.0
        %v1111 = vmul.f32 %v1103, %v1103
        %v1112 = vmul.f32 %v1104, %v1104
        %v1113 = vmul.f32 %v1105, %v1105
        %v1114 = vmul.f32 %v1106, %v1106
        %v1115 = vmul.f32 %v1107, %v1107
        %v1116 = vmul.f32 %v1108, %v1108
        %v1117 = vmul.f32 %v1109, %v1109
        %v1118 = vmul.f32 %v1110, %v1110
        %v1119 = vsel %vm379, %v1111, 0.0
        %1120 = vadd.xlane.f32.xlu0 %v1119
        %v1121 = vpop.xlane.xlu0 %1120
        %v1122 = vsel %vm379, %v1112, 0.0
        %1123 = vadd.xlane.f32.xlu0 %v1122
        %v1124 = vpop.xlane.xlu0 %1123
        %v1125 = vsel %vm379, %v1113, 0.0
        %1126 = vadd.xlane.f32.xlu0 %v1125
        %v1127 = vpop.xlane.xlu0 %1126
        %v1128 = vsel %vm379, %v1114, 0.0
        %1129 = vadd.xlane.f32.xlu0 %v1128
        %v1130 = vpop.xlane.xlu0 %1129
        %v1131 = vsel %vm379, %v1115, 0.0
        %1132 = vadd.xlane.f32.xlu0 %v1131
        %v1133 = vpop.xlane.xlu0 %1132
        %v1134 = vsel %vm379, %v1116, 0.0
        %1135 = vadd.xlane.f32.xlu0 %v1134
        %v1136 = vpop.xlane.xlu0 %1135
        %v1137 = vsel %vm379, %v1117, 0.0
        %1138 = vadd.xlane.f32.xlu0 %v1137
        %v1139 = vpop.xlane.xlu0 %1138
        %v1140 = vsel %vm379, %v1118, 0.0
        %1141 = vadd.xlane.f32.xlu0 %v1140
        %v1142 = vpop.xlane.xlu0 %1141
        %v1151 = vlaneseq
        %v1152 = vand.u32 %v1151, 127
        %v1153 = vlaneseq
        %v1154 = vshrl.u32 %v1153, 7
        %v1155 = vsub.s32 %v1152, %v1154
        %v1156 = vrot.slane %v1121, %v1155
        %v1157 = vadd.s32 %v1152, 4294967288
        %v1158 = vlaneseq
        %v1159 = vshrl.u32 %v1158, 7
        %v1160 = vsub.s32 %v1157, %v1159
        %v1161 = vrot.slane %v1124, %v1160
        %vm1162 = vcmask 130112
        %v1163 = vsel %vm1162, %v1161, %v1156
        %v1164 = vlaneseq
        %v1165 = vshrl.u32 %v1164, 7
        %v1166 = vsub.s32 %v1152, %v1165
        %v1167 = vrot.slane %v1127, %v1166
        %v1168 = vlaneseq
        %v1169 = vshrl.u32 %v1168, 7
        %v1170 = vsub.s32 %v1157, %v1169
        %v1171 = vrot.slane %v1130, %v1170
        %v1172 = vsel %vm1162, %v1171, %v1167
        %v1173 = vlaneseq
        %v1174 = vshrl.u32 %v1173, 7
        %v1175 = vsub.s32 %v1152, %v1174
        %v1176 = vrot.slane %v1133, %v1175
        %v1177 = vlaneseq
        %v1178 = vshrl.u32 %v1177, 7
        %v1179 = vsub.s32 %v1157, %v1178
        %v1180 = vrot.slane %v1136, %v1179
        %v1181 = vsel %vm1162, %v1180, %v1176
        %v1182 = vlaneseq
        %v1183 = vshrl.u32 %v1182, 7
        %v1184 = vsub.s32 %v1152, %v1183
        %v1185 = vrot.slane %v1139, %v1184
        %v1186 = vlaneseq
        %v1187 = vshrl.u32 %v1186, 7
        %v1188 = vsub.s32 %v1157, %v1187
        %v1189 = vrot.slane %v1142, %v1188
        %v1190 = vsel %vm1162, %v1189, %v1185
        %vm1191 = vcmask 1041409
        %v1192 = vsel %vm1191, %v1172, %v1163
        %vm1193 = vcmask 1042434
        %v1194 = vsel %vm1193, %v1181, %v1192
        %vm1195 = vcmask 1043459
        %v1196 = vsel %vm1195, %v1190, %v1194
        %vm1198 = vcmask 125952
        %v1199 = vsel %vm1198, %v1196, 0.0
        %1200 = vadd.xlane.f32.xlu0 %v1199
        %v1201 = vpop.xlane.xlu0 %1200
        %v1202 = vadd.f32 %v1201, 1e-08
        %v1203 = vrsqrt.pop %v1202
        %v1205 = vlaneseq
        %v1206 = vshrl.u32 %v1205, 7
        %v1207 = vsub.s32 0, %v1206
        %v1208 = vrot.slane %v1203, %v1207
        %v1209 = vlaneseq
        %v1210 = vshrl.u32 %v1209, 7
        %v1211 = vsub.s32 1, %v1210
        %v1212 = vrot.slane %v1203, %v1211
        %v1213 = vlaneseq
        %v1214 = vshrl.u32 %v1213, 7
        %v1215 = vsub.s32 2, %v1214
        %v1216 = vrot.slane %v1203, %v1215
        %v1217 = vlaneseq
        %v1218 = vshrl.u32 %v1217, 7
        %v1219 = vsub.s32 3, %v1218
        %v1220 = vrot.slane %v1203, %v1219
        %v1225 = vmul.f32 %v1103, %v1208
        %v1226 = vmul.f32 %v1104, %v1208
        %v1227 = vmul.f32 %v1105, %v1212
        %v1228 = vmul.f32 %v1106, %v1212
        %v1229 = vmul.f32 %v1107, %v1216
        %v1230 = vmul.f32 %v1108, %v1216
        %v1231 = vmul.f32 %v1109, %v1220
        %v1232 = vmul.f32 %v1110, %v1220
        %v1233 = vmul.f32 %v1225, %v1225
        %v1234 = vmul.f32 %v1226, %v1226
        %v1235 = vmul.f32 %v1225, %v1227
        %v1236 = vmul.f32 %v1226, %v1228
        %v1237 = vmul.f32 %v1225, %v1229
        %v1238 = vmul.f32 %v1226, %v1230
        %v1239 = vmul.f32 %v1225, %v1231
        %v1240 = vmul.f32 %v1226, %v1232
        %v1241 = vmul.f32 %v1227, %v1227
        %v1242 = vmul.f32 %v1228, %v1228
        %v1243 = vmul.f32 %v1227, %v1229
        %v1244 = vmul.f32 %v1228, %v1230
        %v1245 = vmul.f32 %v1227, %v1231
        %v1246 = vmul.f32 %v1228, %v1232
        %v1247 = vmul.f32 %v1229, %v1229
        %v1248 = vmul.f32 %v1230, %v1230
        %v1249 = vmul.f32 %v1229, %v1231
        %v1250 = vmul.f32 %v1230, %v1232
        %v1251 = vmul.f32 %v1231, %v1231
        %v1252 = vmul.f32 %v1232, %v1232
        %v1253 = vsel %vm379, %v1233, 0.0
        %1254 = vadd.xlane.f32.xlu0 %v1253
        %v1255 = vpop.xlane.xlu0 %1254
        %v1256 = vsel %vm379, %v1234, 0.0
        %1257 = vadd.xlane.f32.xlu0 %v1256
        %v1258 = vpop.xlane.xlu0 %1257
        %v1259 = vsel %vm379, %v1235, 0.0
        %1260 = vadd.xlane.f32.xlu0 %v1259
        %v1261 = vpop.xlane.xlu0 %1260
        %v1262 = vsel %vm379, %v1236, 0.0
        %1263 = vadd.xlane.f32.xlu0 %v1262
        %v1264 = vpop.xlane.xlu0 %1263
        %v1265 = vsel %vm379, %v1237, 0.0
        %1266 = vadd.xlane.f32.xlu0 %v1265
        %v1267 = vpop.xlane.xlu0 %1266
        %v1268 = vsel %vm379, %v1238, 0.0
        %1269 = vadd.xlane.f32.xlu0 %v1268
        %v1270 = vpop.xlane.xlu0 %1269
        %v1271 = vsel %vm379, %v1239, 0.0
        %1272 = vadd.xlane.f32.xlu0 %v1271
        %v1273 = vpop.xlane.xlu0 %1272
        %v1274 = vsel %vm379, %v1240, 0.0
        %1275 = vadd.xlane.f32.xlu0 %v1274
        %v1276 = vpop.xlane.xlu0 %1275
        %v1277 = vsel %vm379, %v1241, 0.0
        %1278 = vadd.xlane.f32.xlu0 %v1277
        %v1279 = vpop.xlane.xlu0 %1278
        %v1280 = vsel %vm379, %v1242, 0.0
        %1281 = vadd.xlane.f32.xlu0 %v1280
        %v1282 = vpop.xlane.xlu0 %1281
        %v1283 = vsel %vm379, %v1243, 0.0
        %1284 = vadd.xlane.f32.xlu0 %v1283
        %v1285 = vpop.xlane.xlu0 %1284
        %v1286 = vsel %vm379, %v1244, 0.0
        %1287 = vadd.xlane.f32.xlu0 %v1286
        %v1288 = vpop.xlane.xlu0 %1287
        %v1289 = vsel %vm379, %v1245, 0.0
        %1290 = vadd.xlane.f32.xlu0 %v1289
        %v1291 = vpop.xlane.xlu0 %1290
        %v1292 = vsel %vm379, %v1246, 0.0
        %1293 = vadd.xlane.f32.xlu0 %v1292
        %v1294 = vpop.xlane.xlu0 %1293
        %v1295 = vsel %vm379, %v1247, 0.0
        %1296 = vadd.xlane.f32.xlu0 %v1295
        %v1297 = vpop.xlane.xlu0 %1296
        %v1298 = vsel %vm379, %v1248, 0.0
        %1299 = vadd.xlane.f32.xlu0 %v1298
        %v1300 = vpop.xlane.xlu0 %1299
        %v1301 = vsel %vm379, %v1249, 0.0
        %1302 = vadd.xlane.f32.xlu0 %v1301
        %v1303 = vpop.xlane.xlu0 %1302
        %v1304 = vsel %vm379, %v1250, 0.0
        %1305 = vadd.xlane.f32.xlu0 %v1304
        %v1306 = vpop.xlane.xlu0 %1305
        %v1307 = vsel %vm379, %v1251, 0.0
        %1308 = vadd.xlane.f32.xlu0 %v1307
        %v1309 = vpop.xlane.xlu0 %1308
        %v1310 = vsel %vm379, %v1252, 0.0
        %1311 = vadd.xlane.f32.xlu0 %v1310
        %v1312 = vpop.xlane.xlu0 %1311
        %v1333 = vlaneseq
        %v1334 = vshrl.u32 %v1333, 7
        %v1335 = vsub.s32 %v1152, %v1334
        %v1336 = vrot.slane %v1255, %v1335
        %v1337 = vlaneseq
        %v1338 = vshrl.u32 %v1337, 7
        %v1339 = vsub.s32 %v1157, %v1338
        %v1340 = vrot.slane %v1258, %v1339
        %v1341 = vsel %vm1162, %v1340, %v1336
        %v1342 = vlaneseq
        %v1343 = vshrl.u32 %v1342, 7
        %v1344 = vsub.s32 %v1152, %v1343
        %v1345 = vrot.slane %v1261, %v1344
        %v1346 = vlaneseq
        %v1347 = vshrl.u32 %v1346, 7
        %v1348 = vsub.s32 %v1157, %v1347
        %v1349 = vrot.slane %v1264, %v1348
        %v1350 = vsel %vm1162, %v1349, %v1345
        %v1351 = vlaneseq
        %v1352 = vshrl.u32 %v1351, 7
        %v1353 = vsub.s32 %v1152, %v1352
        %v1354 = vrot.slane %v1267, %v1353
        %v1355 = vlaneseq
        %v1356 = vshrl.u32 %v1355, 7
        %v1357 = vsub.s32 %v1157, %v1356
        %v1358 = vrot.slane %v1270, %v1357
        %v1359 = vsel %vm1162, %v1358, %v1354
        %v1360 = vlaneseq
        %v1361 = vshrl.u32 %v1360, 7
        %v1362 = vsub.s32 %v1152, %v1361
        %v1363 = vrot.slane %v1273, %v1362
        %v1364 = vlaneseq
        %v1365 = vshrl.u32 %v1364, 7
        %v1366 = vsub.s32 %v1157, %v1365
        %v1367 = vrot.slane %v1276, %v1366
        %v1368 = vsel %vm1162, %v1367, %v1363
        %v1369 = vlaneseq
        %v1370 = vshrl.u32 %v1369, 7
        %v1371 = vsub.s32 %v1152, %v1370
        %v1372 = vrot.slane %v1279, %v1371
        %v1373 = vlaneseq
        %v1374 = vshrl.u32 %v1373, 7
        %v1375 = vsub.s32 %v1157, %v1374
        %v1376 = vrot.slane %v1282, %v1375
        %v1377 = vsel %vm1162, %v1376, %v1372
        %v1378 = vlaneseq
        %v1379 = vshrl.u32 %v1378, 7
        %v1380 = vsub.s32 %v1152, %v1379
        %v1381 = vrot.slane %v1285, %v1380
        %v1382 = vlaneseq
        %v1383 = vshrl.u32 %v1382, 7
        %v1384 = vsub.s32 %v1157, %v1383
        %v1385 = vrot.slane %v1288, %v1384
        %v1386 = vsel %vm1162, %v1385, %v1381
        %v1387 = vlaneseq
        %v1388 = vshrl.u32 %v1387, 7
        %v1389 = vsub.s32 %v1152, %v1388
        %v1390 = vrot.slane %v1291, %v1389
        %v1391 = vlaneseq
        %v1392 = vshrl.u32 %v1391, 7
        %v1393 = vsub.s32 %v1157, %v1392
        %v1394 = vrot.slane %v1294, %v1393
        %v1395 = vsel %vm1162, %v1394, %v1390
        %v1396 = vlaneseq
        %v1397 = vshrl.u32 %v1396, 7
        %v1398 = vsub.s32 %v1152, %v1397
        %v1399 = vrot.slane %v1297, %v1398
        %v1400 = vlaneseq
        %v1401 = vshrl.u32 %v1400, 7
        %v1402 = vsub.s32 %v1157, %v1401
        %v1403 = vrot.slane %v1300, %v1402
        %v1404 = vsel %vm1162, %v1403, %v1399
        %v1405 = vlaneseq
        %v1406 = vshrl.u32 %v1405, 7
        %v1407 = vsub.s32 %v1152, %v1406
        %v1408 = vrot.slane %v1303, %v1407
        %v1409 = vlaneseq
        %v1410 = vshrl.u32 %v1409, 7
        %v1411 = vsub.s32 %v1157, %v1410
        %v1412 = vrot.slane %v1306, %v1411
        %v1413 = vsel %vm1162, %v1412, %v1408
        %v1414 = vlaneseq
        %v1415 = vshrl.u32 %v1414, 7
        %v1416 = vsub.s32 %v1152, %v1415
        %v1417 = vrot.slane %v1309, %v1416
        %v1418 = vlaneseq
        %v1419 = vshrl.u32 %v1418, 7
        %v1420 = vsub.s32 %v1157, %v1419
        %v1421 = vrot.slane %v1312, %v1420
        %v1422 = vsel %vm1162, %v1421, %v1417
        %v1423 = vsel %vm1191, %v1350, %v1341
        %v1424 = vsel %vm1193, %v1359, %v1423
        %v1425 = vsel %vm1195, %v1368, %v1424
        %v1426 = vsel %vm1191, %v1377, %v1350
        %v1427 = vsel %vm1193, %v1386, %v1426
        %v1428 = vsel %vm1195, %v1395, %v1427
        %v1429 = vsel %vm1191, %v1386, %v1359
        %v1430 = vsel %vm1193, %v1404, %v1429
        %v1431 = vsel %vm1195, %v1413, %v1430
        %v1432 = vsel %vm1191, %v1395, %v1368
        %v1433 = vsel %vm1193, %v1413, %v1432
        %v1434 = vsel %vm1195, %v1422, %v1433
        %v1439 = vsel %vm1198, %v1425, 0.0
        %1440 = vadd.xlane.f32.xlu0 %v1439
        %v1441 = vpop.xlane.xlu0 %1440
        %v1442 = vsel %vm1198, %v1428, 0.0
        %1443 = vadd.xlane.f32.xlu0 %v1442
        %v1444 = vpop.xlane.xlu0 %1443
        %v1445 = vsel %vm1198, %v1431, 0.0
        %1446 = vadd.xlane.f32.xlu0 %v1445
        %v1447 = vpop.xlane.xlu0 %1446
        %v1448 = vsel %vm1198, %v1434, 0.0
        %1449 = vadd.xlane.f32.xlu0 %v1448
        %v1450 = vpop.xlane.xlu0 %1449
        %v1451 = vld [vmem:[%s4] sm:$0xf]
        %v1456 = vlaneseq
        %v1457 = vshrl.u32 %v1456, 7
        %v1458 = vsub.s32 %v1152, %v1457
        %v1459 = vrot.slane %v1441, %v1458
        %v1460 = vlaneseq
        %v1461 = vshrl.u32 %v1460, 7
        %v1462 = vsub.s32 %v1152, %v1461
        %v1463 = vrot.slane %v1444, %v1462
        %v1464 = vlaneseq
        %v1465 = vshrl.u32 %v1464, 7
        %v1466 = vsub.s32 %v1152, %v1465
        %v1467 = vrot.slane %v1447, %v1466
        %v1468 = vlaneseq
        %v1469 = vshrl.u32 %v1468, 7
        %v1470 = vsub.s32 %v1152, %v1469
        %v1471 = vrot.slane %v1450, %v1470
        %v1472 = vsel %vm1191, %v1463, %v1459
        %v1473 = vsel %vm1193, %v1467, %v1472
        %v1474 = vsel %vm1195, %v1471, %v1473
        %vm1475 = vcmask 31744
        %v1476 = vsel %vm1475, %v1474, 0
        %vm1478 = vcmask 1043456
        %v1480 = vsel %vm1478, %v1451, 0
        %1482 = vmatprep.subr.mxu0 0.0
        %1483 = vmatpush1.msra.mxu0 %v1480
        %1484 = vmatprep.subr.mxu0 0.0
        %1485 = vmatpush1.msra.mxu0 0.0
        %1486 = vmatprep.subr.mxu0 0.0
        %1487 = vmatpush1.msra.mxu0 0.0
        %1488 = vmatprep.subr.mxu0 0.0
        %1489 = vmatpush1.msra.mxu0 0.0
        %1490 = vmatprep.subr.mxu0 0.0
        %1491 = vmatpush1.msra.mxu0 0.0
        %1492 = vmatprep.subr.mxu0 0.0
        %1493 = vmatpush1.msra.mxu0 0.0
        %1494 = vmatprep.subr.mxu0 0.0
        %1495 = vmatpush1.msra.mxu0 0.0
        %1496 = vmatprep.subr.mxu0 0.0
        %1497 = vmatpush1.msra.mxu0 0.0
        %1498 = vmatprep.subr.mxu0 0.0
        %1499 = vmatpush1.msra.mxu0 0.0
        %1500 = vmatprep.subr.mxu0 0.0
        %1501 = vmatpush1.msra.mxu0 0.0
        %1502 = vmatprep.subr.mxu0 0.0
        %1503 = vmatpush1.msra.mxu0 0.0
        %1504 = vmatprep.subr.mxu0 0.0
        %1505 = vmatpush1.msra.mxu0 0.0
        %1506 = vmatprep.subr.mxu0 0.0
        %1507 = vmatpush1.msra.mxu0 0.0
        %1508 = vmatprep.subr.mxu0 0.0
        %1509 = vmatpush1.msra.mxu0 0.0
        %1510 = vmatprep.subr.mxu0 0.0
        %1511 = vmatpush1.msra.mxu0 0.0
        %1512 = vmatprep.subr.mxu0 0.0
        %1513 = vmatpush1.msra.mxu0 0.0
        %1514 = vmatprep.subr.mxu0 0.0
        %1515 = vmatpush1.msra.mxu0 0.0
        %1516 = vmatprep.subr.mxu0 0.0
        %1517 = vmatpush1.msra.mxu0 0.0
        %1518 = vmatprep.subr.mxu0 0.0
        %1519 = vmatpush1.msra.mxu0 0.0
        %1520 = vmatprep.subr.mxu0 0.0
        %1521 = vmatpush1.msra.mxu0 0.0
        %1522 = vmatprep.subr.mxu0 0.0
        %1523 = vmatpush1.msra.mxu0 0.0
        %1524 = vmatprep.subr.mxu0 0.0
        %1525 = vmatpush1.msra.mxu0 0.0
        %1526 = vmatprep.subr.mxu0 0.0
        %1527 = vmatpush1.msra.mxu0 0.0
        %1528 = vmatprep.subr.mxu0 0.0
        %1529 = vmatpush1.msra.mxu0 0.0
        %1530 = vmatprep.subr.mxu0 0.0
        %1531 = vmatpush1.msra.mxu0 0.0
        %1532 = vmatprep.subr.mxu0 0.0
        %1533 = vmatpush1.msra.mxu0 0.0
        %1534 = vmatprep.subr.mxu0 0.0
        %1535 = vmatpush1.msra.mxu0 0.0
        %1536 = vmatprep.subr.mxu0 0.0
        %1537 = vmatpush1.msra.mxu0 0.0
        %1538 = vmatprep.subr.mxu0 0.0
        %1539 = vmatpush1.msra.mxu0 0.0
        %1540 = vmatprep.subr.mxu0 0.0
        %1541 = vmatpush1.msra.mxu0 0.0
        %1542 = vmatprep.subr.mxu0 0.0
        %1543 = vmatpush1.msra.mxu0 0.0
        %1544 = vmatprep.subr.mxu0 0.0
        %1545 = vmatpush1.msra.mxu0 0.0
        %1546 = vmatprep.mubr.f32.mxu0 0.0
        %1547 = vmatmul.mubr.f32.gmra.mrb[0].mxu0 %v1476
        %v1548 = vpop.f32.mrb[0].mxu0
        %v1549 = vadd.f32 0.0, %v1548
        %v1550 = vpop.f32.mrb[0].mxu0
        %1551 = vdwg.mxu0
        %v1552 = vmax.f32 %v1549, 0.0
        %v1553 = vld [vmem:[%s5] sm:$0xff]
        %v1554 = vld [vmem:[%s5 + $0x8] sm:$0xff]
        %v1556 = vsel %vm973, %v1552, 0
        %1558 = vmatprep.subr.mxu0 0.0
        %1559 = vmatpush1.msra.mxu0 %v1553
        %1560 = vmatprep.subr.mxu0 0.0
        %1561 = vmatpush1.msra.mxu0 %v1554
        %1562 = vmatprep.subr.mxu0 0.0
        %1563 = vmatpush1.msra.mxu0 0.0
        %1564 = vmatprep.subr.mxu0 0.0
        %1565 = vmatpush1.msra.mxu0 0.0
        %1566 = vmatprep.subr.mxu0 0.0
        %1567 = vmatpush1.msra.mxu0 0.0
        %1568 = vmatprep.subr.mxu0 0.0
        %1569 = vmatpush1.msra.mxu0 0.0
        %1570 = vmatprep.subr.mxu0 0.0
        %1571 = vmatpush1.msra.mxu0 0.0
        %1572 = vmatprep.subr.mxu0 0.0
        %1573 = vmatpush1.msra.mxu0 0.0
        %1574 = vmatprep.subr.mxu0 0.0
        %1575 = vmatpush1.msra.mxu0 0.0
        %1576 = vmatprep.subr.mxu0 0.0
        %1577 = vmatpush1.msra.mxu0 0.0
        %1578 = vmatprep.subr.mxu0 0.0
        %1579 = vmatpush1.msra.mxu0 0.0
        %1580 = vmatprep.subr.mxu0 0.0
        %1581 = vmatpush1.msra.mxu0 0.0
        %1582 = vmatprep.subr.mxu0 0.0
        %1583 = vmatpush1.msra.mxu0 0.0
        %1584 = vmatprep.subr.mxu0 0.0
        %1585 = vmatpush1.msra.mxu0 0.0
        %1586 = vmatprep.subr.mxu0 0.0
        %1587 = vmatpush1.msra.mxu0 0.0
        %1588 = vmatprep.subr.mxu0 0.0
        %1589 = vmatpush1.msra.mxu0 0.0
        %1590 = vmatprep.subr.mxu0 0.0
        %1591 = vmatpush1.msra.mxu0 0.0
        %1592 = vmatprep.subr.mxu0 0.0
        %1593 = vmatpush1.msra.mxu0 0.0
        %1594 = vmatprep.subr.mxu0 0.0
        %1595 = vmatpush1.msra.mxu0 0.0
        %1596 = vmatprep.subr.mxu0 0.0
        %1597 = vmatpush1.msra.mxu0 0.0
        %1598 = vmatprep.subr.mxu0 0.0
        %1599 = vmatpush1.msra.mxu0 0.0
        %1600 = vmatprep.subr.mxu0 0.0
        %1601 = vmatpush1.msra.mxu0 0.0
        %1602 = vmatprep.subr.mxu0 0.0
        %1603 = vmatpush1.msra.mxu0 0.0
        %1604 = vmatprep.subr.mxu0 0.0
        %1605 = vmatpush1.msra.mxu0 0.0
        %1606 = vmatprep.subr.mxu0 0.0
        %1607 = vmatpush1.msra.mxu0 0.0
        %1608 = vmatprep.subr.mxu0 0.0
        %1609 = vmatpush1.msra.mxu0 0.0
        %1610 = vmatprep.subr.mxu0 0.0
        %1611 = vmatpush1.msra.mxu0 0.0
        %1612 = vmatprep.subr.mxu0 0.0
        %1613 = vmatpush1.msra.mxu0 0.0
        %1614 = vmatprep.subr.mxu0 0.0
        %1615 = vmatpush1.msra.mxu0 0.0
        %1616 = vmatprep.subr.mxu0 0.0
        %1617 = vmatpush1.msra.mxu0 0.0
        %1618 = vmatprep.subr.mxu0 0.0
        %1619 = vmatpush1.msra.mxu0 0.0
        %1620 = vmatprep.subr.mxu0 0.0
        %1621 = vmatpush1.msra.mxu0 0.0
        %1622 = vmatprep.mubr.f32.mxu0 0.0
        %1623 = vmatmul.mubr.f32.gmra.mrb[0].mxu0 %v1556
        %v1624 = vpop.f32.mrb[0].mxu0
        %v1625 = vadd.f32 0.0, %v1624
        %v1626 = vpop.f32.mrb[0].mxu0
        %1627 = vdwg.mxu0
        %v1629 = vsel %vm1478, %v1625, 0
        %1631 = vmatprep.subr.mxu0 0.0
        %1632 = vmatpush1.msra.mxu0 %v1629
        %1633 = vmatprep.subr.mxu0 0.0
        %1634 = vmatpush1.msra.mxu0 0.0
        %1635 = vmatprep.subr.mxu0 0.0
        %1636 = vmatpush1.msra.mxu0 0.0
        %1637 = vmatprep.subr.mxu0 0.0
        %1638 = vmatpush1.msra.mxu0 0.0
        %1639 = vmatprep.subr.mxu0 0.0
        %1640 = vmatpush1.msra.mxu0 0.0
        %1641 = vmatprep.subr.mxu0 0.0
        %1642 = vmatpush1.msra.mxu0 0.0
        %1643 = vmatprep.subr.mxu0 0.0
        %1644 = vmatpush1.msra.mxu0 0.0
        %1645 = vmatprep.subr.mxu0 0.0
        %1646 = vmatpush1.msra.mxu0 0.0
        %1647 = vmatprep.subr.mxu0 0.0
        %1648 = vmatpush1.msra.mxu0 0.0
        %1649 = vmatprep.subr.mxu0 0.0
        %1650 = vmatpush1.msra.mxu0 0.0
        %1651 = vmatprep.subr.mxu0 0.0
        %1652 = vmatpush1.msra.mxu0 0.0
        %1653 = vmatprep.subr.mxu0 0.0
        %1654 = vmatpush1.msra.mxu0 0.0
        %1655 = vmatprep.subr.mxu0 0.0
        %1656 = vmatpush1.msra.mxu0 0.0
        %1657 = vmatprep.subr.mxu0 0.0
        %1658 = vmatpush1.msra.mxu0 0.0
        %1659 = vmatprep.subr.mxu0 0.0
        %1660 = vmatpush1.msra.mxu0 0.0
        %1661 = vmatprep.subr.mxu0 0.0
        %1662 = vmatpush1.msra.mxu0 0.0
        %1663 = vmatprep.subr.mxu0 0.0
        %1664 = vmatpush1.msra.mxu0 0.0
        %1665 = vmatprep.subr.mxu0 0.0
        %1666 = vmatpush1.msra.mxu0 0.0
        %1667 = vmatprep.subr.mxu0 0.0
        %1668 = vmatpush1.msra.mxu0 0.0
        %1669 = vmatprep.subr.mxu0 0.0
        %1670 = vmatpush1.msra.mxu0 0.0
        %1671 = vmatprep.subr.mxu0 0.0
        %1672 = vmatpush1.msra.mxu0 0.0
        %1673 = vmatprep.subr.mxu0 0.0
        %1674 = vmatpush1.msra.mxu0 0.0
        %1675 = vmatprep.subr.mxu0 0.0
        %1676 = vmatpush1.msra.mxu0 0.0
        %1677 = vmatprep.subr.mxu0 0.0
        %1678 = vmatpush1.msra.mxu0 0.0
        %1679 = vmatprep.subr.mxu0 0.0
        %1680 = vmatpush1.msra.mxu0 0.0
        %1681 = vmatprep.subr.mxu0 0.0
        %1682 = vmatpush1.msra.mxu0 0.0
        %1683 = vmatprep.subr.mxu0 0.0
        %1684 = vmatpush1.msra.mxu0 0.0
        %1685 = vmatprep.subr.mxu0 0.0
        %1686 = vmatpush1.msra.mxu0 0.0
        %1687 = vmatprep.subr.mxu0 0.0
        %1688 = vmatpush1.msra.mxu0 0.0
        %1689 = vmatprep.subr.mxu0 0.0
        %1690 = vmatpush1.msra.mxu0 0.0
        %1691 = vmatprep.subr.mxu0 0.0
        %1692 = vmatpush1.msra.mxu0 0.0
        %1693 = vmatprep.subr.mxu0 0.0
        %1694 = vmatpush1.msra.mxu0 0.0
        %1695 = vmatprep.mubr.f32.mxu0 0.0
        %1696 = vmatmul.mubr.f32.gmra.mrb[0].mxu0 %v1476
        %v1697 = vpop.f32.mrb[0].mxu0
        %v1698 = vadd.f32 0.0, %v1697
        %v1699 = vpop.f32.mrb[0].mxu0
        %1700 = vdwg.mxu0
        %v1701 = vsel %vm1198, %v1698, 0.0
        %v1702 = vrot.slane %v1701, 4
        %v1703 = vadd.f32 %v1701, %v1702
        %v1704 = vrot.slane %v1703, 2
        %v1705 = vadd.f32 %v1703, %v1704
        %v1706 = vrot.slane %v1705, 1
        %v1707 = vadd.f32 %v1705, %v1706
        %v1708 = vrcp.pop 4.0
        %v1709 = vmul.f32 %v1707, %v1708
        %v1710 = vld [vmem:[%s6] sm:$0xff]
        %v1711 = vld [vmem:[%s6 + $0x8] sm:$0xff]
        %v1712 = vld [vmem:[%s7] sm:$0x1]
        %v1714 = vsel %vm973, %v1709, 0
        %1716 = vmatprep.subr.mxu0 0.0
        %1717 = vmatpush1.msra.mxu0 %v1710
        %1718 = vmatprep.subr.mxu0 0.0
        %1719 = vmatpush1.msra.mxu0 %v1711
        %1720 = vmatprep.subr.mxu0 0.0
        %1721 = vmatpush1.msra.mxu0 0.0
        %1722 = vmatprep.subr.mxu0 0.0
        %1723 = vmatpush1.msra.mxu0 0.0
        %1724 = vmatprep.subr.mxu0 0.0
        %1725 = vmatpush1.msra.mxu0 0.0
        %1726 = vmatprep.subr.mxu0 0.0
        %1727 = vmatpush1.msra.mxu0 0.0
        %1728 = vmatprep.subr.mxu0 0.0
        %1729 = vmatpush1.msra.mxu0 0.0
        %1730 = vmatprep.subr.mxu0 0.0
        %1731 = vmatpush1.msra.mxu0 0.0
        %1732 = vmatprep.subr.mxu0 0.0
        %1733 = vmatpush1.msra.mxu0 0.0
        %1734 = vmatprep.subr.mxu0 0.0
        %1735 = vmatpush1.msra.mxu0 0.0
        %1736 = vmatprep.subr.mxu0 0.0
        %1737 = vmatpush1.msra.mxu0 0.0
        %1738 = vmatprep.subr.mxu0 0.0
        %1739 = vmatpush1.msra.mxu0 0.0
        %1740 = vmatprep.subr.mxu0 0.0
        %1741 = vmatpush1.msra.mxu0 0.0
        %1742 = vmatprep.subr.mxu0 0.0
        %1743 = vmatpush1.msra.mxu0 0.0
        %1744 = vmatprep.subr.mxu0 0.0
        %1745 = vmatpush1.msra.mxu0 0.0
        %1746 = vmatprep.subr.mxu0 0.0
        %1747 = vmatpush1.msra.mxu0 0.0
        %1748 = vmatprep.subr.mxu0 0.0
        %1749 = vmatpush1.msra.mxu0 0.0
        %1750 = vmatprep.subr.mxu0 0.0
        %1751 = vmatpush1.msra.mxu0 0.0
        %1752 = vmatprep.subr.mxu0 0.0
        %1753 = vmatpush1.msra.mxu0 0.0
        %1754 = vmatprep.subr.mxu0 0.0
        %1755 = vmatpush1.msra.mxu0 0.0
        %1756 = vmatprep.subr.mxu0 0.0
        %1757 = vmatpush1.msra.mxu0 0.0
        %1758 = vmatprep.subr.mxu0 0.0
        %1759 = vmatpush1.msra.mxu0 0.0
        %1760 = vmatprep.subr.mxu0 0.0
        %1761 = vmatpush1.msra.mxu0 0.0
        %1762 = vmatprep.subr.mxu0 0.0
        %1763 = vmatpush1.msra.mxu0 0.0
        %1764 = vmatprep.subr.mxu0 0.0
        %1765 = vmatpush1.msra.mxu0 0.0
        %1766 = vmatprep.subr.mxu0 0.0
        %1767 = vmatpush1.msra.mxu0 0.0
        %1768 = vmatprep.subr.mxu0 0.0
        %1769 = vmatpush1.msra.mxu0 0.0
        %1770 = vmatprep.subr.mxu0 0.0
        %1771 = vmatpush1.msra.mxu0 0.0
        %1772 = vmatprep.subr.mxu0 0.0
        %1773 = vmatpush1.msra.mxu0 0.0
        %1774 = vmatprep.subr.mxu0 0.0
        %1775 = vmatpush1.msra.mxu0 0.0
        %1776 = vmatprep.subr.mxu0 0.0
        %1777 = vmatpush1.msra.mxu0 0.0
        %1778 = vmatprep.subr.mxu0 0.0
        %1779 = vmatpush1.msra.mxu0 0.0
        %1780 = vmatprep.mubr.f32.mxu0 0.0
        %1781 = vmatmul.mubr.f32.gmra.mrb[0].mxu0 %v1714
        %v1782 = vpop.f32.mrb[0].mxu0
        %v1783 = vadd.f32 %v1712, %v1782
        %v1784 = vpop.f32.mrb[0].mxu0
        %1785 = vdwg.mxu0
        %v1786 = vxor.u32 %v1783, 2147483648
        %v1787 = vmul.f32 %v1786, 1.442695
        %v1788 = vpow.pop %v1787
        %v1789 = vadd.f32 %v1788, 1.0
        %v1790 = vrcp.pop %v1789
        %v1791 = vmul.f32 1.0, %v1790
        %vm1792 = vcmask 8192
        %1793 = vst.msk [vmem:[%s362] sm:$0x1] %vm1792, %v1791
        %s1794 = sand.u32 %s214, 1
        %s1795 = scalar_lea.sflag [#allocation4], %s1794
        %s1796 = sand.u32 %s214, 1
        %s1797 = scalar_lea.vmem [#allocation7], %s1796
        // Predicated region
        $region61: #{tpu_custom_call.1} parent=51 // pred_check
          %p1798 = pneg %p224
        $region62: #{tpu_custom_call.1} parent=51 // pred_check_branch
          %1800 = sbr.rel (%p1798) target = $region64
        $region63: #{tpu_custom_call.1} parent=51 // pred_region
          %s1802 = ssub.s32 16, 16
          %1803 = vsyncadd %s1795, %s1802
          %s1804 = smul.addr %s28, 16
          %s1805 = scalar_lea.hbm %s8, %s1804
          %s1807 = sshll.u32 %s1797, 4
          %s1808 = int_to_ptr.vmem [resolvable:$true] %s1807
          %1810 = dma.vmem_to_hbm [thread:$0]  %s1808, 16, %s1805, %s1795
        $region64: #{tpu_custom_call.1} parent=51 // pred_fallthru
          _
      $region52: #{tpu_custom_call.1} parent=5 // pred_fallthru
        _
      %p1811 = scmp.le.s32.totalorder 2, %s23
      // Predicated region
      $region65: #{tpu_custom_call.1} parent=5 // pred_check
        %p1812 = pneg %p1811
      $region66: #{tpu_custom_call.1} parent=5 // pred_check_branch
        %1814 = sbr.rel (%p1812) target = $region68
      $region67: #{tpu_custom_call.1} parent=5 // pred_region
        %s1815 = ssub.s32 %s23, 2
        // Predicated region
        $region69: #{tpu_custom_call.1} parent=67 // pred_check
          %p1816 = pneg %p230
        $region70: #{tpu_custom_call.1} parent=67 // pred_check_branch
          %1818 = sbr.rel (%p1816) target = $region72
        $region71: #{tpu_custom_call.1} parent=67 // pred_region
          %s1819 = sand.u32 %s215, 1
          %s1820 = scalar_lea.sflag [#allocation4], %s1819
          %s1821 = sand.u32 %s215, 1
          %s1822 = scalar_lea.vmem [#allocation7], %s1821
          %1823 = dma.done %s1820, 16
        $region72: #{tpu_custom_call.1} parent=67 // pred_fallthru
          _
      $region68: #{tpu_custom_call.1} parent=5 // pred_fallthru
        _
    $region6: #{tpu_custom_call.1} parent=1 // loop_footer
      %s27 = sadd.s32 1, %s23
    $region7: #{tpu_custom_call.1} parent=1 // loop_footer_branch
      %22 = sbr.rel target = $region3
    $region8: #{tpu_custom_call.1} parent=1 // loop_exit
      _
    %1824 = vsyncpa [#allocation3], 1
    %s1825 = scalar_lea.sflag [#allocation3], 1
    %1826 = vsyncpa %s1825, 1
    %1827 = vsyncpa [#allocation6], 1
    %s1828 = scalar_lea.sflag [#allocation6], 1
    %1829 = vsyncpa %s1828, 1
    %1830 = vsyncpa [#allocation4], 1
    %s1831 = scalar_lea.sflag [#allocation4], 1
    %1832 = vsyncpa %s1831, 1

</llo_original>
